<compile_context>
chip_gen: v5e
topology: v5e:2x2
jax: 0.10.0
libtpu: 0.0.40
codegen_flags: <defaults>
</compile_context>

<pallas_src>
import functools

import jax
import jax.numpy as jnp
from jax.experimental import pallas as pl
from jax.experimental.pallas import tpu as pltpu

_LANE = 128

# (Cin, Cout, K, stride, padding) matching the PyTorch module (static).
_LAYER_SPECS = [
    (16, 32, 2, 2, 1),
    (32, 64, 4, 2, 1),
    (64, 128, 4, 2, 1),
    (128, 64, 4, 2, 1),
    (64, 3, 4, 2, 1),
]


def _gemm_bias_act_kernel(x_ref, w_ref, b_ref, o_ref, *, act):
    """One parity class: (M, K) @ (K, C) + bias -> ReLU (-> Tanh).

    x_ref: (1, M, K)  bf16 tap-folded im2col block
    w_ref: (1, K, C)  bf16 sub-kernel (taps folded into K)
    b_ref: (1, C)     f32 bias
    o_ref: (1, M, C)  f32 output
    """
    acc = jnp.dot(x_ref[0], w_ref[0], preferred_element_type=jnp.float32)
    acc = acc + b_ref[...]                  # (1, C) broadcasts over M
    acc = jnp.maximum(acc, 0.0)             # ReLU after every conv
    if act == "relu_tanh":                  # final layer: tanh(relu(x))
        acc = jnp.tanh(acc)
    o_ref[0] = acc.astype(o_ref.dtype)


def _subpixel_taps(k, p, size_in, size_out):
    """Static per-parity tap plan for a stride-2 transposed conv (one axis).

    For parity r in {0, 1}:
        y_r[q] = sum_t xpad[off_t + q] * w[kidx_t],   q in [0, n_out)
    with xpad = zero-pad(x, (pad_lo, pad_hi)).
    Returns [(pad_lo, pad_hi, [(off, kidx), ...], n_out) for r in (0, 1)].
    """
    plans = []
    for r in range(2):
        n_out = (size_out - r + 1) // 2
        c = r + p
        rem, half = c % 2, c // 2
        n_taps = (k - rem + 1) // 2
        pad_lo = max(0, (n_taps - 1) - half)
        pad_hi = max(0, (n_out - 1) + half - (size_in - 1))
        taps = [(pad_lo + half - t, rem + 2 * t) for t in range(n_taps)]
        plans.append((pad_lo, pad_hi, taps, n_out))
    return plans


def conv_transpose2d_pallas(x_nhwc, w_t, b, k, stride, padding, act):
    """PyTorch-equivalent ConvTranspose2d(stride=2) + ReLU (+Tanh), NHWC."""
    assert stride == 2, "sub-pixel decomposition assumes stride == 2"
    n, h, w, cin = x_nhwc.shape
    assert w_t.shape[0] == cin and w_t.shape[2] == k and w_t.shape[3] == k
    cout = w_t.shape[1]
    ho = (h - 1) * stride - 2 * padding + k
    wo = (w - 1) * stride - 2 * padding + k
    assert ho % 2 == 0 and wo % 2 == 0
    hq, wq = ho // 2, wo // 2

    plans_y = _subpixel_taps(k, padding, h, ho)
    plans_x = _subpixel_taps(k, padding, w, wo)

    # Build, per parity class, the tap-folded im2col matrix and sub-kernel.
    xcols, wsubs = [], []
    for ry in range(2):
        pad_lo_y, pad_hi_y, taps_y, hq_r = plans_y[ry]
        for rx in range(2):
            pad_lo_x, pad_hi_x, taps_x, wq_r = plans_x[rx]
            assert hq_r == hq and wq_r == wq
            xp = jnp.pad(x_nhwc, ((0, 0), (pad_lo_y, pad_hi_y),
                                  (pad_lo_x, pad_hi_x), (0, 0)))
            pieces, wparts = [], []
            for off_y, ky in taps_y:
                for off_x, kx in taps_x:
                    pieces.append(xp[:, off_y:off_y + hq, off_x:off_x + wq, :])
                    wparts.append(w_t[:, :, ky, kx])          # (Cin, Cout)
            xcol = jnp.concatenate(pieces, axis=-1)           # (N,Hq,Wq,T*Cin)
            xcols.append(xcol.reshape(n * hq * wq, -1))       # (M, K)
            wsubs.append(jnp.concatenate(wparts, axis=0))     # (K, Cout)

    m = n * hq * wq
    kdim = xcols[0].shape[-1]
    cout_p = ((cout + _LANE - 1) // _LANE) * _LANE            # lane-dense out

    xcol_all = jnp.stack(xcols, axis=0).astype(jnp.bfloat16)  # (4, M, K)
    w_all = jnp.stack(wsubs, axis=0)                          # (4, K, Cout)
    if cout_p != cout:
        w_all = jnp.pad(w_all, ((0, 0), (0, 0), (0, cout_p - cout)))
        b = jnp.pad(b, (0, cout_p - cout))
    w_all = w_all.astype(jnp.bfloat16)
    b2 = b.reshape(1, cout_p).astype(jnp.float32)

    kernel = functools.partial(_gemm_bias_act_kernel, act=act)
    out = pl.pallas_call(
        kernel,
        out_shape=jax.ShapeDtypeStruct((4, m, cout_p), jnp.float32),
        grid_spec=pltpu.PrefetchScalarGridSpec(
            num_scalar_prefetch=0,
            grid=(4,),
            in_specs=[
                pl.BlockSpec((1, m, kdim), lambda i: (i, 0, 0)),
                pl.BlockSpec((1, kdim, cout_p), lambda i: (i, 0, 0)),
                pl.BlockSpec((1, cout_p), lambda i: (0, 0)),
            ],
            out_specs=pl.BlockSpec((1, m, cout_p), lambda i: (i, 0, 0)),
        ),
        compiler_params=pltpu.CompilerParams(
            dimension_semantics=("parallel",)),
    )(xcol_all, w_all, b2)

    # Interleave the 4 parity outputs: y[2qy+ry, 2qx+rx] = y_{ry,rx}[qy, qx].
    out = out.reshape(2, 2, n, hq, wq, cout_p)
    out = jnp.transpose(out, (2, 3, 0, 4, 1, 5)).reshape(n, ho, wo, cout_p)
    return out[..., :cout]


def init_params():
    """Deterministic synthetic parameters (PyTorch ConvTranspose2d shapes)."""
    base = jax.random.PRNGKey(0)
    params = []
    for idx, (cin, cout, k, _, _) in enumerate(_LAYER_SPECS):
        kw_key, kb_key = jax.random.split(jax.random.fold_in(base, idx))
        fan_in = cin * k * k
        wgt = jax.random.normal(kw_key, (cin, cout, k, k), jnp.float32)
        wgt = wgt / jnp.sqrt(jnp.float32(fan_in))
        bias = 0.01 * jax.random.normal(kb_key, (cout,), jnp.float32)
        params.append((wgt, bias))
    return params


@jax.jit
def decoder_forward(x_nchw, params):
    """Pallas decoder.  Accepts NCHW (PyTorch convention), returns NCHW."""
    x = jnp.transpose(x_nchw, (0, 2, 3, 1))          # -> NHWC
    last = len(_LAYER_SPECS) - 1
    for idx, ((wgt, bias), (_, _, k, s, p)) in enumerate(
            zip(params, _LAYER_SPECS)):
        act = "relu_tanh" if idx == last else "relu"
        x = conv_transpose2d_pallas(x, wgt, bias, k, s, p, act)
    return jnp.transpose(x, (0, 3, 1, 2))            # -> NCHW


def decoder_ref(x_nchw, params):
    """Pure-JAX reference (high precision) for validation."""
    x = jnp.transpose(x_nchw, (0, 2, 3, 1))
    last = len(_LAYER_SPECS) - 1
    for idx, ((w_t, b), (_, _, k, s, p)) in enumerate(
            zip(params, _LAYER_SPECS)):
        pe = k - 1 - p
        w_hwio = jnp.transpose(w_t[:, :, ::-1, ::-1], (2, 3, 0, 1))
        y = jax.lax.conv_general_dilated(
            x, w_hwio, window_strides=(1, 1),
            padding=[(pe, pe), (pe, pe)],
            lhs_dilation=(s, s),
            dimension_numbers=("NHWC", "HWIO", "NHWC"),
            precision=jax.lax.Precision.HIGHEST)
        y = jnp.maximum(y + b, 0.0)
        if idx == last:
            y = jnp.tanh(y)
        x = y
    return jnp.transpose(x, (0, 3, 1, 2))


if __name__ == "__main__":
    params = init_params()
    # Small latent consistent with conv1's 16 input channels: (N=2, C=16, 2, 2)
    x = jax.random.normal(jax.random.PRNGKey(0), (2, 16, 2, 2), jnp.float32)

    y = decoder_forward(x, params)
    y = jax.block_until_ready(y)

    assert y.shape == (2, 3, 32, 32), y.shape
    y_ref = decoder_ref(x, params)
    max_err = float(jnp.max(jnp.abs(y - y_ref)))
    assert max_err < 5e-2, max_err   # bf16 operands, f32 accumulate

    print("KERNEL_OK")
</pallas_src>

<mosaic_0001>
module attributes {stable_mosaic.version = 11 : i64} {
  func.func @_gemm_bias_act_kernel(%arg0: i32, %arg1: memref<1x2x16xbf16, #tpu.memory_space<vmem>>, %arg2: memref<1x16x128xbf16, #tpu.memory_space<vmem>>, %arg3: memref<1x128xf32, #tpu.memory_space<vmem>>, %arg4: memref<1x2x128xf32, #tpu.memory_space<vmem>>) attributes {dimension_semantics = [#tpu.dimension_semantics<parallel>], iteration_bounds = array<i64: 4>, scalar_prefetch = 0 : i64, scratch_operands = 0 : i64, tpu.core_type = #tpu.core_type<tc>, window_params = [{transform_indices = @transform_0, window_bounds = array<i64: 1, 2, 16>}, {transform_indices = @transform_1, window_bounds = array<i64: 1, 16, 128>}, {pipeline_mode = #tpu.pipeline_mode<synchronous>, transform_indices = @transform_2, window_bounds = array<i64: 1, 128>}, {transform_indices = @transform_3, window_bounds = array<i64: 1, 2, 128>}]} {
    %c0 = arith.constant 0 : index
    %c0_0 = arith.constant 0 : index
    %c0_1 = arith.constant 0 : index
    %0 = vector.load %arg1[%c0, %c0_0, %c0_1] : memref<1x2x16xbf16, #tpu.memory_space<vmem>>, vector<1x2x16xbf16>
    %1 = vector.shape_cast %0 : vector<1x2x16xbf16> to vector<2x16xbf16>
    %c0_2 = arith.constant 0 : index
    %c0_3 = arith.constant 0 : index
    %c0_4 = arith.constant 0 : index
    %2 = vector.load %arg2[%c0_2, %c0_3, %c0_4] : memref<1x16x128xbf16, #tpu.memory_space<vmem>>, vector<1x16x128xbf16>
    %3 = vector.shape_cast %2 : vector<1x16x128xbf16> to vector<16x128xbf16>
    %cst = arith.constant dense<0.000000e+00> : vector<2x128xf32>
    %4 = tpu.matmul %1, %3, %cst {dimension_numbers = #tpu.dot_dimension_numbers<[1], [0], [0], [1], [0, 0, 1, 1], [], []>} : vector<2x16xbf16>, vector<16x128xbf16>, vector<2x128xf32> -> vector<2x128xf32>
    %c0_5 = arith.constant 0 : index
    %c0_6 = arith.constant 0 : index
    %5 = vector.load %arg3[%c0_5, %c0_6] : memref<1x128xf32, #tpu.memory_space<vmem>>, vector<1x128xf32>
    %6 = vector.broadcast %5 : vector<1x128xf32> to vector<2x128xf32>
    %7 = arith.addf %4, %6 : vector<2x128xf32>
    %cst_7 = arith.constant 0.000000e+00 : f32
    %8 = vector.broadcast %cst_7 : f32 to vector<2x128xf32>
    %9 = arith.maximumf %7, %8 : vector<2x128xf32>
    %c0_8 = arith.constant 0 : index
    %c0_9 = arith.constant 0 : index
    %c0_10 = arith.constant 0 : index
    %10 = vector.load %arg4[%c0_8, %c0_9, %c0_10] : memref<1x2x128xf32, #tpu.memory_space<vmem>>, vector<1x2x128xf32>
    %11 = vector.shape_cast %10 : vector<1x2x128xf32> to vector<2x128xf32>
    %12 = vector.shape_cast %9 : vector<2x128xf32> to vector<1x2x128xf32>
    tpu.vector_store %arg4[%c0_8, %c0_9, %c0_10], %12 {strides = array<i32>} : memref<1x2x128xf32, #tpu.memory_space<vmem>>, vector<1x2x128xf32>,
    return
  }
  func.func @transform_0(%arg0: i32) -> (i32, i32, i32) {
    %c0_i32 = arith.constant 0 : i32
    %c0_i32_0 = arith.constant 0 : i32
    %c0_i32_1 = arith.constant 0 : i32
    return %arg0, %c0_i32, %c0_i32_0 : i32, i32, i32
  }
  func.func @transform_1(%arg0: i32) -> (i32, i32, i32) {
    %c0_i32 = arith.constant 0 : i32
    %c0_i32_0 = arith.constant 0 : i32
    %c0_i32_1 = arith.constant 0 : i32
    return %arg0, %c0_i32, %c0_i32_0 : i32, i32, i32
  }
  func.func @transform_2(%arg0: i32) -> (i32, i32) {
    %c0_i32 = arith.constant 0 : i32
    %c0_i32_0 = arith.constant 0 : i32
    %c0_i32_1 = arith.constant 0 : i32
    return %c0_i32, %c0_i32_0 : i32, i32
  }
  func.func @transform_3(%arg0: i32) -> (i32, i32, i32) {
    %c0_i32 = arith.constant 0 : i32
    %c0_i32_0 = arith.constant 0 : i32
    %c0_i32_1 = arith.constant 0 : i32
    return %arg0, %c0_i32, %c0_i32_0 : i32, i32, i32
  }
}

module attributes {stable_mosaic.version = 11 : i64} {
  func.func @_gemm_bias_act_kernel(%arg0: i32, %arg1: memref<1x8x128xbf16, #tpu.memory_space<vmem>>, %arg2: memref<1x128x128xbf16, #tpu.memory_space<vmem>>, %arg3: memref<1x128xf32, #tpu.memory_space<vmem>>, %arg4: memref<1x8x128xf32, #tpu.memory_space<vmem>>) attributes {dimension_semantics = [#tpu.dimension_semantics<parallel>], iteration_bounds = array<i64: 4>, scalar_prefetch = 0 : i64, scratch_operands = 0 : i64, tpu.core_type = #tpu.core_type<tc>, window_params = [{transform_indices = @transform_0, window_bounds = array<i64: 1, 8, 128>}, {transform_indices = @transform_1, window_bounds = array<i64: 1, 128, 128>}, {pipeline_mode = #tpu.pipeline_mode<synchronous>, transform_indices = @transform_2, window_bounds = array<i64: 1, 128>}, {transform_indices = @transform_3, window_bounds = array<i64: 1, 8, 128>}]} {
    %c0 = arith.constant 0 : index
    %c0_0 = arith.constant 0 : index
    %c0_1 = arith.constant 0 : index
    %0 = vector.load %arg1[%c0, %c0_0, %c0_1] : memref<1x8x128xbf16, #tpu.memory_space<vmem>>, vector<1x8x128xbf16>
    %1 = vector.shape_cast %0 : vector<1x8x128xbf16> to vector<8x128xbf16>
    %c0_2 = arith.constant 0 : index
    %c0_3 = arith.constant 0 : index
    %c0_4 = arith.constant 0 : index
    %2 = vector.load %arg2[%c0_2, %c0_3, %c0_4] : memref<1x128x128xbf16, #tpu.memory_space<vmem>>, vector<1x128x128xbf16>
    %3 = vector.shape_cast %2 : vector<1x128x128xbf16> to vector<128x128xbf16>
    %cst = arith.constant dense<0.000000e+00> : vector<8x128xf32>
    %4 = tpu.matmul %1, %3, %cst {dimension_numbers = #tpu.dot_dimension_numbers<[1], [0], [0], [1], [0, 0, 1, 1], [], []>} : vector<8x128xbf16>, vector<128x128xbf16>, vector<8x128xf32> -> vector<8x128xf32>
    %c0_5 = arith.constant 0 : index
    %c0_6 = arith.constant 0 : index
    %5 = vector.load %arg3[%c0_5, %c0_6] : memref<1x128xf32, #tpu.memory_space<vmem>>, vector<1x128xf32>
    %6 = vector.broadcast %5 : vector<1x128xf32> to vector<8x128xf32>
    %7 = arith.addf %4, %6 : vector<8x128xf32>
    %cst_7 = arith.constant 0.000000e+00 : f32
    %8 = vector.broadcast %cst_7 : f32 to vector<8x128xf32>
    %9 = arith.maximumf %7, %8 : vector<8x128xf32>
    %c0_8 = arith.constant 0 : index
    %c0_9 = arith.constant 0 : index
    %c0_10 = arith.constant 0 : index
    %10 = vector.load %arg4[%c0_8, %c0_9, %c0_10] : memref<1x8x128xf32, #tpu.memory_space<vmem>>, vector<1x8x128xf32>
    %11 = vector.shape_cast %10 : vector<1x8x128xf32> to vector<8x128xf32>
    %12 = vector.shape_cast %9 : vector<8x128xf32> to vector<1x8x128xf32>
    tpu.vector_store %arg4[%c0_8, %c0_9, %c0_10], %12 {strides = array<i32>} : memref<1x8x128xf32, #tpu.memory_space<vmem>>, vector<1x8x128xf32>,
    return
  }
  func.func @transform_0(%arg0: i32) -> (i32, i32, i32) {
    %c0_i32 = arith.constant 0 : i32
    %c0_i32_0 = arith.constant 0 : i32
    %c0_i32_1 = arith.constant 0 : i32
    return %arg0, %c0_i32, %c0_i32_0 : i32, i32, i32
  }
  func.func @transform_1(%arg0: i32) -> (i32, i32, i32) {
    %c0_i32 = arith.constant 0 : i32
    %c0_i32_0 = arith.constant 0 : i32
    %c0_i32_1 = arith.constant 0 : i32
    return %arg0, %c0_i32, %c0_i32_0 : i32, i32, i32
  }
  func.func @transform_2(%arg0: i32) -> (i32, i32) {
    %c0_i32 = arith.constant 0 : i32
    %c0_i32_0 = arith.constant 0 : i32
    %c0_i32_1 = arith.constant 0 : i32
    return %c0_i32, %c0_i32_0 : i32, i32
  }
  func.func @transform_3(%arg0: i32) -> (i32, i32, i32) {
    %c0_i32 = arith.constant 0 : i32
    %c0_i32_0 = arith.constant 0 : i32
    %c0_i32_1 = arith.constant 0 : i32
    return %arg0, %c0_i32, %c0_i32_0 : i32, i32, i32
  }
}

module attributes {stable_mosaic.version = 11 : i64} {
  func.func @_gemm_bias_act_kernel(%arg0: i32, %arg1: memref<1x32x256xbf16, #tpu.memory_space<vmem>>, %arg2: memref<1x256x128xbf16, #tpu.memory_space<vmem>>, %arg3: memref<1x128xf32, #tpu.memory_space<vmem>>, %arg4: memref<1x32x128xf32, #tpu.memory_space<vmem>>) attributes {dimension_semantics = [#tpu.dimension_semantics<parallel>], iteration_bounds = array<i64: 4>, scalar_prefetch = 0 : i64, scratch_operands = 0 : i64, tpu.core_type = #tpu.core_type<tc>, window_params = [{transform_indices = @transform_0, window_bounds = array<i64: 1, 32, 256>}, {transform_indices = @transform_1, window_bounds = array<i64: 1, 256, 128>}, {pipeline_mode = #tpu.pipeline_mode<synchronous>, transform_indices = @transform_2, window_bounds = array<i64: 1, 128>}, {transform_indices = @transform_3, window_bounds = array<i64: 1, 32, 128>}]} {
    %c0 = arith.constant 0 : index
    %c0_0 = arith.constant 0 : index
    %c0_1 = arith.constant 0 : index
    %0 = vector.load %arg1[%c0, %c0_0, %c0_1] : memref<1x32x256xbf16, #tpu.memory_space<vmem>>, vector<1x32x256xbf16>
    %1 = vector.shape_cast %0 : vector<1x32x256xbf16> to vector<32x256xbf16>
    %c0_2 = arith.constant 0 : index
    %c0_3 = arith.constant 0 : index
    %c0_4 = arith.constant 0 : index
    %2 = vector.load %arg2[%c0_2, %c0_3, %c0_4] : memref<1x256x128xbf16, #tpu.memory_space<vmem>>, vector<1x256x128xbf16>
    %3 = vector.shape_cast %2 : vector<1x256x128xbf16> to vector<256x128xbf16>
    %cst = arith.constant dense<0.000000e+00> : vector<32x128xf32>
    %4 = tpu.matmul %1, %3, %cst {dimension_numbers = #tpu.dot_dimension_numbers<[1], [0], [0], [1], [0, 0, 1, 1], [], []>} : vector<32x256xbf16>, vector<256x128xbf16>, vector<32x128xf32> -> vector<32x128xf32>
    %c0_5 = arith.constant 0 : index
    %c0_6 = arith.constant 0 : index
    %5 = vector.load %arg3[%c0_5, %c0_6] : memref<1x128xf32, #tpu.memory_space<vmem>>, vector<1x128xf32>
    %6 = vector.broadcast %5 : vector<1x128xf32> to vector<32x128xf32>
    %7 = arith.addf %4, %6 : vector<32x128xf32>
    %cst_7 = arith.constant 0.000000e+00 : f32
    %8 = vector.broadcast %cst_7 : f32 to vector<32x128xf32>
    %9 = arith.maximumf %7, %8 : vector<32x128xf32>
    %c0_8 = arith.constant 0 : index
    %c0_9 = arith.constant 0 : index
    %c0_10 = arith.constant 0 : index
    %10 = vector.load %arg4[%c0_8, %c0_9, %c0_10] : memref<1x32x128xf32, #tpu.memory_space<vmem>>, vector<1x32x128xf32>
    %11 = vector.shape_cast %10 : vector<1x32x128xf32> to vector<32x128xf32>
    %12 = vector.shape_cast %9 : vector<32x128xf32> to vector<1x32x128xf32>
    tpu.vector_store %arg4[%c0_8, %c0_9, %c0_10], %12 {strides = array<i32>} : memref<1x32x128xf32, #tpu.memory_space<vmem>>, vector<1x32x128xf32>,
    return
  }
  func.func @transform_0(%arg0: i32) -> (i32, i32, i32) {
    %c0_i32 = arith.constant 0 : i32
    %c0_i32_0 = arith.constant 0 : i32
    %c0_i32_1 = arith.constant 0 : i32
    return %arg0, %c0_i32, %c0_i32_0 : i32, i32, i32
  }
  func.func @transform_1(%arg0: i32) -> (i32, i32, i32) {
    %c0_i32 = arith.constant 0 : i32
    %c0_i32_0 = arith.constant 0 : i32
    %c0_i32_1 = arith.constant 0 : i32
    return %arg0, %c0_i32, %c0_i32_0 : i32, i32, i32
  }
  func.func @transform_2(%arg0: i32) -> (i32, i32) {
    %c0_i32 = arith.constant 0 : i32
    %c0_i32_0 = arith.constant 0 : i32
    %c0_i32_1 = arith.constant 0 : i32
    return %c0_i32, %c0_i32_0 : i32, i32
  }
  func.func @transform_3(%arg0: i32) -> (i32, i32, i32) {
    %c0_i32 = arith.constant 0 : i32
    %c0_i32_0 = arith.constant 0 : i32
    %c0_i32_1 = arith.constant 0 : i32
    return %arg0, %c0_i32, %c0_i32_0 : i32, i32, i32
  }
}

module attributes {stable_mosaic.version = 11 : i64} {
  func.func @_gemm_bias_act_kernel(%arg0: i32, %arg1: memref<1x128x512xbf16, #tpu.memory_space<vmem>>, %arg2: memref<1x512x128xbf16, #tpu.memory_space<vmem>>, %arg3: memref<1x128xf32, #tpu.memory_space<vmem>>, %arg4: memref<1x128x128xf32, #tpu.memory_space<vmem>>) attributes {dimension_semantics = [#tpu.dimension_semantics<parallel>], iteration_bounds = array<i64: 4>, scalar_prefetch = 0 : i64, scratch_operands = 0 : i64, tpu.core_type = #tpu.core_type<tc>, window_params = [{transform_indices = @transform_0, window_bounds = array<i64: 1, 128, 512>}, {transform_indices = @transform_1, window_bounds = array<i64: 1, 512, 128>}, {pipeline_mode = #tpu.pipeline_mode<synchronous>, transform_indices = @transform_2, window_bounds = array<i64: 1, 128>}, {transform_indices = @transform_3, window_bounds = array<i64: 1, 128, 128>}]} {
    %c0 = arith.constant 0 : index
    %c0_0 = arith.constant 0 : index
    %c0_1 = arith.constant 0 : index
    %0 = vector.load %arg1[%c0, %c0_0, %c0_1] : memref<1x128x512xbf16, #tpu.memory_space<vmem>>, vector<1x128x512xbf16>
    %1 = vector.shape_cast %0 : vector<1x128x512xbf16> to vector<128x512xbf16>
    %c0_2 = arith.constant 0 : index
    %c0_3 = arith.constant 0 : index
    %c0_4 = arith.constant 0 : index
    %2 = vector.load %arg2[%c0_2, %c0_3, %c0_4] : memref<1x512x128xbf16, #tpu.memory_space<vmem>>, vector<1x512x128xbf16>
    %3 = vector.shape_cast %2 : vector<1x512x128xbf16> to vector<512x128xbf16>
    %cst = arith.constant dense<0.000000e+00> : vector<128x128xf32>
    %4 = tpu.matmul %1, %3, %cst {dimension_numbers = #tpu.dot_dimension_numbers<[1], [0], [0], [1], [0, 0, 1, 1], [], []>} : vector<128x512xbf16>, vector<512x128xbf16>, vector<128x128xf32> -> vector<128x128xf32>
    %c0_5 = arith.constant 0 : index
    %c0_6 = arith.constant 0 : index
    %5 = vector.load %arg3[%c0_5, %c0_6] : memref<1x128xf32, #tpu.memory_space<vmem>>, vector<1x128xf32>
    %6 = vector.broadcast %5 : vector<1x128xf32> to vector<128x128xf32>
    %7 = arith.addf %4, %6 : vector<128x128xf32>
    %cst_7 = arith.constant 0.000000e+00 : f32
    %8 = vector.broadcast %cst_7 : f32 to vector<128x128xf32>
    %9 = arith.maximumf %7, %8 : vector<128x128xf32>
    %c0_8 = arith.constant 0 : index
    %c0_9 = arith.constant 0 : index
    %c0_10 = arith.constant 0 : index
    %10 = vector.load %arg4[%c0_8, %c0_9, %c0_10] : memref<1x128x128xf32, #tpu.memory_space<vmem>>, vector<1x128x128xf32>
    %11 = vector.shape_cast %10 : vector<1x128x128xf32> to vector<128x128xf32>
    %12 = vector.shape_cast %9 : vector<128x128xf32> to vector<1x128x128xf32>
    tpu.vector_store %arg4[%c0_8, %c0_9, %c0_10], %12 {strides = array<i32>} : memref<1x128x128xf32, #tpu.memory_space<vmem>>, vector<1x128x128xf32>,
    return
  }
  func.func @transform_0(%arg0: i32) -> (i32, i32, i32) {
    %c0_i32 = arith.constant 0 : i32
    %c0_i32_0 = arith.constant 0 : i32
    %c0_i32_1 = arith.constant 0 : i32
    return %arg0, %c0_i32, %c0_i32_0 : i32, i32, i32
  }
  func.func @transform_1(%arg0: i32) -> (i32, i32, i32) {
    %c0_i32 = arith.constant 0 : i32
    %c0_i32_0 = arith.constant 0 : i32
    %c0_i32_1 = arith.constant 0 : i32
    return %arg0, %c0_i32, %c0_i32_0 : i32, i32, i32
  }
  func.func @transform_2(%arg0: i32) -> (i32, i32) {
    %c0_i32 = arith.constant 0 : i32
    %c0_i32_0 = arith.constant 0 : i32
    %c0_i32_1 = arith.constant 0 : i32
    return %c0_i32, %c0_i32_0 : i32, i32
  }
  func.func @transform_3(%arg0: i32) -> (i32, i32, i32) {
    %c0_i32 = arith.constant 0 : i32
    %c0_i32_0 = arith.constant 0 : i32
    %c0_i32_1 = arith.constant 0 : i32
    return %arg0, %c0_i32, %c0_i32_0 : i32, i32, i32
  }
}

module attributes {stable_mosaic.version = 11 : i64} {
  func.func @_gemm_bias_act_kernel(%arg0: i32, %arg1: memref<1x512x256xbf16, #tpu.memory_space<vmem>>, %arg2: memref<1x256x128xbf16, #tpu.memory_space<vmem>>, %arg3: memref<1x128xf32, #tpu.memory_space<vmem>>, %arg4: memref<1x512x128xf32, #tpu.memory_space<vmem>>) attributes {dimension_semantics = [#tpu.dimension_semantics<parallel>], iteration_bounds = array<i64: 4>, scalar_prefetch = 0 : i64, scratch_operands = 0 : i64, tpu.core_type = #tpu.core_type<tc>, window_params = [{transform_indices = @transform_0, window_bounds = array<i64: 1, 512, 256>}, {transform_indices = @transform_1, window_bounds = array<i64: 1, 256, 128>}, {pipeline_mode = #tpu.pipeline_mode<synchronous>, transform_indices = @transform_2, window_bounds = array<i64: 1, 128>}, {transform_indices = @transform_3, window_bounds = array<i64: 1, 512, 128>}]} {
    %c0 = arith.constant 0 : index
    %c0_0 = arith.constant 0 : index
    %c0_1 = arith.constant 0 : index
    %0 = vector.load %arg1[%c0, %c0_0, %c0_1] : memref<1x512x256xbf16, #tpu.memory_space<vmem>>, vector<1x512x256xbf16>
    %1 = vector.shape_cast %0 : vector<1x512x256xbf16> to vector<512x256xbf16>
    %c0_2 = arith.constant 0 : index
    %c0_3 = arith.constant 0 : index
    %c0_4 = arith.constant 0 : index
    %2 = vector.load %arg2[%c0_2, %c0_3, %c0_4] : memref<1x256x128xbf16, #tpu.memory_space<vmem>>, vector<1x256x128xbf16>
    %3 = vector.shape_cast %2 : vector<1x256x128xbf16> to vector<256x128xbf16>
    %cst = arith.constant dense<0.000000e+00> : vector<512x128xf32>
    %4 = tpu.matmul %1, %3, %cst {dimension_numbers = #tpu.dot_dimension_numbers<[1], [0], [0], [1], [0, 0, 1, 1], [], []>} : vector<512x256xbf16>, vector<256x128xbf16>, vector<512x128xf32> -> vector<512x128xf32>
    %c0_5 = arith.constant 0 : index
    %c0_6 = arith.constant 0 : index
    %5 = vector.load %arg3[%c0_5, %c0_6] : memref<1x128xf32, #tpu.memory_space<vmem>>, vector<1x128xf32>
    %6 = vector.broadcast %5 : vector<1x128xf32> to vector<512x128xf32>
    %7 = arith.addf %4, %6 : vector<512x128xf32>
    %cst_7 = arith.constant 0.000000e+00 : f32
    %8 = vector.broadcast %cst_7 : f32 to vector<512x128xf32>
    %9 = arith.maximumf %7, %8 : vector<512x128xf32>
    %10 = math.tanh %9 : vector<512x128xf32>
    %c0_8 = arith.constant 0 : index
    %c0_9 = arith.constant 0 : index
    %c0_10 = arith.constant 0 : index
    %11 = vector.load %arg4[%c0_8, %c0_9, %c0_10] : memref<1x512x128xf32, #tpu.memory_space<vmem>>, vector<1x512x128xf32>
    %12 = vector.shape_cast %11 : vector<1x512x128xf32> to vector<512x128xf32>
    %13 = vector.shape_cast %10 : vector<512x128xf32> to vector<1x512x128xf32>
    tpu.vector_store %arg4[%c0_8, %c0_9, %c0_10], %13 {strides = array<i32>} : memref<1x512x128xf32, #tpu.memory_space<vmem>>, vector<1x512x128xf32>,
    return
  }
  func.func @transform_0(%arg0: i32) -> (i32, i32, i32) {
    %c0_i32 = arith.constant 0 : i32
    %c0_i32_0 = arith.constant 0 : i32
    %c0_i32_1 = arith.constant 0 : i32
    return %arg0, %c0_i32, %c0_i32_0 : i32, i32, i32
  }
  func.func @transform_1(%arg0: i32) -> (i32, i32, i32) {
    %c0_i32 = arith.constant 0 : i32
    %c0_i32_0 = arith.constant 0 : i32
    %c0_i32_1 = arith.constant 0 : i32
    return %arg0, %c0_i32, %c0_i32_0 : i32, i32, i32
  }
  func.func @transform_2(%arg0: i32) -> (i32, i32) {
    %c0_i32 = arith.constant 0 : i32
    %c0_i32_0 = arith.constant 0 : i32
    %c0_i32_1 = arith.constant 0 : i32
    return %c0_i32, %c0_i32_0 : i32, i32
  }
  func.func @transform_3(%arg0: i32) -> (i32, i32, i32) {
    %c0_i32 = arith.constant 0 : i32
    %c0_i32_0 = arith.constant 0 : i32
    %c0_i32_1 = arith.constant 0 : i32
    return %arg0, %c0_i32, %c0_i32_0 : i32, i32, i32
  }
}

</mosaic_0001>

<llo_original>
// kernel: decoder_forward.5
$region0: #{decoder_forward.5}
  #allocation0 [shape = 'u32[]', space=smem, size = 0x4, offset = 0x4, fixed_abs, tag = 'smem constant byte address 0x4 - core index']
  #allocation1 [shape = 'u32[72,128]{1,0:T(1,128)}', space=vmem, size = 0x9000, scoped, tag = 'internal scratch']
  %s0 = inlined_call_operand.vmem [shape: bf16[4,2,16], index: 0, kind: input, shape index: {}]
  %s1 = inlined_call_operand.vmem [shape: bf16[4,16,128], index: 1, kind: input, shape index: {}]
  %s2 = inlined_call_operand.vmem [shape: f32[1,128], index: 2, kind: input, shape index: {}]
  %s3 = inlined_call_operand.vmem [shape: f32[4,2,128], index: 3, kind: output, shape index: {}]
  %s4 = sld [smem:[#allocation0]]
  $region45: #{decoder_forward.5} parent=0
    _
  %s6 = ssub.s32 1, %s4
  %s7 = scalar_select 0, %s6, %s4
  loop: start=0, step=1, limit=6
  $region2: #{decoder_forward.5} parent=0 // loop_pre_header
    _
  $region3: #{decoder_forward.5} parent=0 // loop_header
    %s9 = sphi 0, %s13
    %p10 = scmp.ge.s32.totalorder %s9, 6
    %s19 = sphi 0, %s21
    %s22 = sphi 0, %s19
    %s23 = sphi 0, %s22
    %s39 = sphi 0, %s23
    %s45 = sphi 0, %s47
    %s48 = sphi 0, %s45
    %s49 = sphi 0, %s48
    %s65 = sphi 0, %s49
    %s69 = sphi 0, %s69
    %s71 = sphi 0, %s69
    %s72 = sphi 0, %s71
    %s86 = sphi 0, %s72
    %s92 = sphi 0, %s94
    %s95 = sphi 0, %s92
    %s96 = sphi 0, %s95
    %s112 = sphi 0, %s96
  $region4: #{decoder_forward.5} parent=0 // loop_header_branch
    %12 = sbr.rel (%p10) target = $region8
  $region5: #{decoder_forward.5} parent=0 // loop_body
    %s14 = ssub.s32 %s9, 1
    %s15 = ssub.s32 %s9, 2
    %s16 = sadd.s32 %s9, 1
    %s17 = ssub.s32 %s9, %s16
    %p18 = scmp.eq.s32.totalorder %s17, 0
    %s20 = sadd.s32 %s19, 1
    %s21 = scalar_select %p18, %s19, %s20
    %p24 = pneg %p18
    %p25 = scmp.eq.s32.totalorder %s9, 3
    %p26 = por %p24, %p25
    %p27 = scmp.ne.s32.totalorder %s19, %s22
    %p28 = scmp.eq.s32.totalorder %s9, 0
    %p29 = por %p27, %p28
    %p30 = scmp.ne.s32.totalorder %s19, %s22
    %p31 = scmp.eq.s32.totalorder %s14, 3
    %p32 = por %p30, %p31
    %p33 = scmp.ne.s32.totalorder %s22, %s23
    %p34 = scmp.eq.s32.totalorder %s14, 0
    %p35 = por %p33, %p34
    %p36 = scmp.ne.s32.totalorder %s22, %s23
    %p37 = scmp.eq.s32.totalorder %s15, 3
    %p38 = por %p36, %p37
    %p40 = scmp.ne.s32.totalorder %s23, %s39
    %p41 = scmp.eq.s32.totalorder %s15, 0
    %p42 = por %p40, %p41
    %s43 = ssub.s32 %s9, %s16
    %p44 = scmp.eq.s32.totalorder %s43, 0
    %s46 = sadd.s32 %s45, 1
    %s47 = scalar_select %p44, %s45, %s46
    %p50 = pneg %p44
    %p51 = scmp.eq.s32.totalorder %s9, 3
    %p52 = por %p50, %p51
    %p53 = scmp.ne.s32.totalorder %s45, %s48
    %p54 = scmp.eq.s32.totalorder %s9, 0
    %p55 = por %p53, %p54
    %p56 = scmp.ne.s32.totalorder %s45, %s48
    %p57 = scmp.eq.s32.totalorder %s14, 3
    %p58 = por %p56, %p57
    %p59 = scmp.ne.s32.totalorder %s48, %s49
    %p60 = scmp.eq.s32.totalorder %s14, 0
    %p61 = por %p59, %p60
    %p62 = scmp.ne.s32.totalorder %s48, %s49
    %p63 = scmp.eq.s32.totalorder %s15, 3
    %p64 = por %p62, %p63
    %p66 = scmp.ne.s32.totalorder %s49, %s65
    %p67 = scmp.eq.s32.totalorder %s15, 0
    %p68 = por %p66, %p67
    %s70 = sadd.s32 %s69, 1
    %p73 = scmp.eq.s32.totalorder %s9, 3
    %p74 = scmp.ne.s32.totalorder %s69, %s71
    %p75 = scmp.eq.s32.totalorder %s9, 0
    %p76 = por %p74, %p75
    %p77 = scmp.ne.s32.totalorder %s69, %s71
    %p78 = scmp.eq.s32.totalorder %s14, 3
    %p79 = por %p77, %p78
    %p80 = scmp.ne.s32.totalorder %s71, %s72
    %p81 = scmp.eq.s32.totalorder %s14, 0
    %p82 = por %p80, %p81
    %p83 = scmp.ne.s32.totalorder %s71, %s72
    %p84 = scmp.eq.s32.totalorder %s15, 3
    %p85 = por %p83, %p84
    %p87 = scmp.ne.s32.totalorder %s72, %s86
    %p88 = scmp.eq.s32.totalorder %s15, 0
    %p89 = por %p87, %p88
    %s90 = ssub.s32 %s9, %s16
    %p91 = scmp.eq.s32.totalorder %s90, 0
    %s93 = sadd.s32 %s92, 1
    %s94 = scalar_select %p91, %s92, %s93
    %p97 = pneg %p91
    %p98 = scmp.eq.s32.totalorder %s9, 3
    %p99 = por %p97, %p98
    %p100 = scmp.ne.s32.totalorder %s92, %s95
    %p101 = scmp.eq.s32.totalorder %s9, 0
    %p102 = por %p100, %p101
    %p103 = scmp.ne.s32.totalorder %s92, %s95
    %p104 = scmp.eq.s32.totalorder %s14, 3
    %p105 = por %p103, %p104
    %p106 = scmp.ne.s32.totalorder %s95, %s96
    %p107 = scmp.eq.s32.totalorder %s14, 0
    %p108 = por %p106, %p107
    %p109 = scmp.ne.s32.totalorder %s95, %s96
    %p110 = scmp.eq.s32.totalorder %s15, 3
    %p111 = por %p109, %p110
    %p113 = scmp.ne.s32.totalorder %s96, %s112
    %p114 = scmp.eq.s32.totalorder %s15, 0
    %p115 = por %p113, %p114
    %p116 = scmp.le.s32.totalorder 1, %s9
    %p117 = scmp.lt.s32.totalorder %s9, 5
    %p118 = pnand %p116, %p117
    %p119 = pneg %p118
    // Predicated region
    $region9: #{decoder_forward.5} parent=5 // pred_check
      _
    $region10: #{decoder_forward.5} parent=5 // pred_check_branch
      %121 = sbr.rel (%p118) target = $region12
    $region11: #{decoder_forward.5} parent=5 // pred_region
      %s122 = ssub.s32 %s9, 1
      // Predicated region
      $region13: #{decoder_forward.5} parent=11 // pred_check
        %p123 = pneg %p82
      $region14: #{decoder_forward.5} parent=11 // pred_check_branch
        %125 = sbr.rel (%p123) target = $region16
      $region15: #{decoder_forward.5} parent=11 // pred_region
        _
      $region16: #{decoder_forward.5} parent=11 // pred_fallthru
        _
    $region12: #{decoder_forward.5} parent=5 // pred_fallthru
      _
    %p126 = scmp.lt.s32.totalorder %s9, 4
    // Predicated region
    $region17: #{decoder_forward.5} parent=5 // pred_check
      %p127 = pneg %p126
    $region18: #{decoder_forward.5} parent=5 // pred_check_branch
      %129 = sbr.rel (%p127) target = $region20
    $region19: #{decoder_forward.5} parent=5 // pred_region
      // Predicated region
      $region21: #{decoder_forward.5} parent=19 // pred_check
        %p130 = pneg %p29
      $region22: #{decoder_forward.5} parent=19 // pred_check_branch
        %132 = sbr.rel (%p130) target = $region24
      $region23: #{decoder_forward.5} parent=19 // pred_region
        %p133 = scmp.lt.s32.totalorder %s9, 3
        %s134 = scalar_select %p133, %s9, 3
        %s135 = scalar_lea.vmem %s0, %s134
      $region24: #{decoder_forward.5} parent=19 // pred_fallthru
        _
      // Predicated region
      $region25: #{decoder_forward.5} parent=19 // pred_check
        %p136 = pneg %p55
      $region26: #{decoder_forward.5} parent=19 // pred_check_branch
        %138 = sbr.rel (%p136) target = $region28
      $region27: #{decoder_forward.5} parent=19 // pred_region
        %p139 = scmp.lt.s32.totalorder %s9, 3
        %s140 = scalar_select %p139, %s9, 3
        %s141 = smul.addr %s140, 2
        %s142 = smul.addr %s141, 4
        %s143 = scalar_lea.vmem %s1, %s142
      $region28: #{decoder_forward.5} parent=19 // pred_fallthru
        _
    $region20: #{decoder_forward.5} parent=5 // pred_fallthru
      _
    %p144 = scmp.le.s32.totalorder 1, %s9
    %p145 = scmp.lt.s32.totalorder %s9, 5
    %p146 = pnand %p144, %p145
    %p147 = pneg %p146
    // Predicated region
    $region29: #{decoder_forward.5} parent=5 // pred_check
      _
    $region30: #{decoder_forward.5} parent=5 // pred_check_branch
      %149 = sbr.rel (%p146) target = $region32
    $region31: #{decoder_forward.5} parent=5 // pred_region
      %s150 = ssub.s32 %s9, 1
      %p151 = scmp.lt.s32.totalorder %s14, 3
      %s152 = scalar_select %p151, %s14, 3
      %s153 = scalar_lea.vmem %s0, %s152
      %p154 = pneg %p35
      %p155 = pneg %p32
      %p156 = scmp.lt.s32.totalorder %s14, 3
      %s157 = scalar_select %p156, %s14, 3
      %s158 = smul.addr %s157, 2
      %s159 = smul.addr %s158, 4
      %s160 = scalar_lea.vmem %s1, %s159
      %p161 = pneg %p61
      %p162 = pneg %p58
      %p163 = pneg %p82
      %p164 = pneg %p79
      %p165 = pneg %p108
      %p166 = pneg %p105
      %p167 = scmp.lt.s32.totalorder %s14, 3
      %s168 = scalar_select %p167, %s14, 3
      %s169 = smul.addr %s168, 2
      %s170 = scalar_lea.vmem %s3, %s169
      %p171 = scmp.lt.s32.totalorder %s14, 3
      %s172 = scalar_select %p171, %s14, 3
      %s173 = scalar_lea.vmem %s0, %s172
      %p174 = scmp.lt.s32.totalorder %s14, 3
      %s175 = scalar_select %p174, %s14, 3
      %s176 = smul.addr %s175, 2
      %s177 = smul.addr %s176, 4
      %s178 = scalar_lea.vmem %s1, %s177
      %p179 = scmp.lt.s32.totalorder %s14, 3
      %s180 = scalar_select %p179, %s14, 3
      %s181 = smul.addr %s180, 2
      %s182 = scalar_lea.vmem %s3, %s181
      %v184 = vld [vmem:[%s173] sm:$0x1]
      %v185 = vld [vmem:[%s178] sm:$0xf]
      %v186 = vld [vmem:[%s178 + $0x4] sm:$0xf]
      %v187 = vld [vmem:[%s2] sm:$0x1]
      %v189 = vperm.slane %v187, 0
      %v193 = vunpack.c.l.b16 %v185
      %v194 = vunpack.c.l.b16 %v186
      %v195 = vpack.c.b16 %v194, %v193
      %vm197 = vcmask 130048
      %v199 = vsel %vm197, %v184, 0
      %201 = vmatpush.bf16.msra.mxu0 0
      %202 = vmatpush.bf16.msra.mxu0 0
      %203 = vmatpush.bf16.msra.mxu0 0
      %204 = vmatpush.bf16.msra.mxu0 0
      %205 = vmatpush.bf16.msra.mxu0 0
      %206 = vmatpush.bf16.msra.mxu0 0
      %207 = vmatpush.bf16.msra.mxu0 0
      %208 = vmatpush.bf16.msra.mxu0 %v195
      %209 = vmatmul.bf16.gmra.mxu0 %v199
      %v210 = vpop.f32.mrf.mxu0
      %v211 = vadd.f32 %v189, %v210
      %v212 = vpop.f32.mrf.mxu0
      %213 = vdwg.mxu0
      %v214 = vmax.f32 %v211, 0.0
      %215 = vst [vmem:[%s182] sm:$0x3] %v214
      %p216 = scmp.lt.s32.totalorder %s14, 3
      %s217 = scalar_select %p216, %s14, 3
      %s218 = smul.addr %s217, 2
      %s219 = scalar_lea.vmem %s3, %s218
      // Predicated region
      $region33: #{decoder_forward.5} parent=31 // pred_check
        %p220 = pneg %p105
      $region34: #{decoder_forward.5} parent=31 // pred_check_branch
        %222 = sbr.rel (%p220) target = $region36
      $region35: #{decoder_forward.5} parent=31 // pred_region
        _
      $region36: #{decoder_forward.5} parent=31 // pred_fallthru
        _
    $region32: #{decoder_forward.5} parent=5 // pred_fallthru
      _
    %p223 = scmp.le.s32.totalorder 2, %s9
    // Predicated region
    $region37: #{decoder_forward.5} parent=5 // pred_check
      %p224 = pneg %p223
    $region38: #{decoder_forward.5} parent=5 // pred_check_branch
      %226 = sbr.rel (%p224) target = $region40
    $region39: #{decoder_forward.5} parent=5 // pred_region
      %s227 = ssub.s32 %s9, 2
      // Predicated region
      $region41: #{decoder_forward.5} parent=39 // pred_check
        %p228 = pneg %p111
      $region42: #{decoder_forward.5} parent=39 // pred_check_branch
        %230 = sbr.rel (%p228) target = $region44
      $region43: #{decoder_forward.5} parent=39 // pred_region
        %p231 = scmp.lt.s32.totalorder %s15, 3
        %s232 = scalar_select %p231, %s15, 3
        %s233 = smul.addr %s232, 2
        %s234 = scalar_lea.vmem %s3, %s233
      $region44: #{decoder_forward.5} parent=39 // pred_fallthru
        _
    $region40: #{decoder_forward.5} parent=5 // pred_fallthru
      _
  $region6: #{decoder_forward.5} parent=0 // loop_footer
    %s13 = sadd.s32 1, %s9
  $region7: #{decoder_forward.5} parent=0 // loop_footer_branch
    %8 = sbr.rel target = $region3
  $region8: #{decoder_forward.5} parent=0 // loop_exit
    _

// kernel: decoder_forward.6
$region0: #{decoder_forward.6}
  #allocation0 [shape = 'u32[]', space=smem, size = 0x4, offset = 0x4, fixed_abs, tag = 'smem constant byte address 0x4 - core index']
  #allocation1 [shape = 'u32[72,128]{1,0:T(1,128)}', space=vmem, size = 0x9000, scoped, tag = 'internal scratch']
  %s0 = inlined_call_operand.vmem [shape: bf16[4,8,128], index: 0, kind: input, shape index: {}]
  %s1 = inlined_call_operand.vmem [shape: bf16[4,128,128], index: 1, kind: input, shape index: {}]
  %s2 = inlined_call_operand.vmem [shape: f32[1,128], index: 2, kind: input, shape index: {}]
  %s3 = inlined_call_operand.vmem [shape: f32[4,8,128], index: 3, kind: output, shape index: {}]
  %s4 = sld [smem:[#allocation0]]
  $region45: #{decoder_forward.6} parent=0
    _
  %s6 = ssub.s32 1, %s4
  %s7 = scalar_select 0, %s6, %s4
  loop: start=0, step=1, limit=6
  $region2: #{decoder_forward.6} parent=0 // loop_pre_header
    _
  $region3: #{decoder_forward.6} parent=0 // loop_header
    %s9 = sphi 0, %s13
    %p10 = scmp.ge.s32.totalorder %s9, 6
    %s19 = sphi 0, %s21
    %s22 = sphi 0, %s19
    %s23 = sphi 0, %s22
    %s39 = sphi 0, %s23
    %s45 = sphi 0, %s47
    %s48 = sphi 0, %s45
    %s49 = sphi 0, %s48
    %s65 = sphi 0, %s49
    %s69 = sphi 0, %s69
    %s71 = sphi 0, %s69
    %s72 = sphi 0, %s71
    %s86 = sphi 0, %s72
    %s92 = sphi 0, %s94
    %s95 = sphi 0, %s92
    %s96 = sphi 0, %s95
    %s112 = sphi 0, %s96
  $region4: #{decoder_forward.6} parent=0 // loop_header_branch
    %12 = sbr.rel (%p10) target = $region8
  $region5: #{decoder_forward.6} parent=0 // loop_body
    %s14 = ssub.s32 %s9, 1
    %s15 = ssub.s32 %s9, 2
    %s16 = sadd.s32 %s9, 1
    %s17 = ssub.s32 %s9, %s16
    %p18 = scmp.eq.s32.totalorder %s17, 0
    %s20 = sadd.s32 %s19, 1
    %s21 = scalar_select %p18, %s19, %s20
    %p24 = pneg %p18
    %p25 = scmp.eq.s32.totalorder %s9, 3
    %p26 = por %p24, %p25
    %p27 = scmp.ne.s32.totalorder %s19, %s22
    %p28 = scmp.eq.s32.totalorder %s9, 0
    %p29 = por %p27, %p28
    %p30 = scmp.ne.s32.totalorder %s19, %s22
    %p31 = scmp.eq.s32.totalorder %s14, 3
    %p32 = por %p30, %p31
    %p33 = scmp.ne.s32.totalorder %s22, %s23
    %p34 = scmp.eq.s32.totalorder %s14, 0
    %p35 = por %p33, %p34
    %p36 = scmp.ne.s32.totalorder %s22, %s23
    %p37 = scmp.eq.s32.totalorder %s15, 3
    %p38 = por %p36, %p37
    %p40 = scmp.ne.s32.totalorder %s23, %s39
    %p41 = scmp.eq.s32.totalorder %s15, 0
    %p42 = por %p40, %p41
    %s43 = ssub.s32 %s9, %s16
    %p44 = scmp.eq.s32.totalorder %s43, 0
    %s46 = sadd.s32 %s45, 1
    %s47 = scalar_select %p44, %s45, %s46
    %p50 = pneg %p44
    %p51 = scmp.eq.s32.totalorder %s9, 3
    %p52 = por %p50, %p51
    %p53 = scmp.ne.s32.totalorder %s45, %s48
    %p54 = scmp.eq.s32.totalorder %s9, 0
    %p55 = por %p53, %p54
    %p56 = scmp.ne.s32.totalorder %s45, %s48
    %p57 = scmp.eq.s32.totalorder %s14, 3
    %p58 = por %p56, %p57
    %p59 = scmp.ne.s32.totalorder %s48, %s49
    %p60 = scmp.eq.s32.totalorder %s14, 0
    %p61 = por %p59, %p60
    %p62 = scmp.ne.s32.totalorder %s48, %s49
    %p63 = scmp.eq.s32.totalorder %s15, 3
    %p64 = por %p62, %p63
    %p66 = scmp.ne.s32.totalorder %s49, %s65
    %p67 = scmp.eq.s32.totalorder %s15, 0
    %p68 = por %p66, %p67
    %s70 = sadd.s32 %s69, 1
    %p73 = scmp.eq.s32.totalorder %s9, 3
    %p74 = scmp.ne.s32.totalorder %s69, %s71
    %p75 = scmp.eq.s32.totalorder %s9, 0
    %p76 = por %p74, %p75
    %p77 = scmp.ne.s32.totalorder %s69, %s71
    %p78 = scmp.eq.s32.totalorder %s14, 3
    %p79 = por %p77, %p78
    %p80 = scmp.ne.s32.totalorder %s71, %s72
    %p81 = scmp.eq.s32.totalorder %s14, 0
    %p82 = por %p80, %p81
    %p83 = scmp.ne.s32.totalorder %s71, %s72
    %p84 = scmp.eq.s32.totalorder %s15, 3
    %p85 = por %p83, %p84
    %p87 = scmp.ne.s32.totalorder %s72, %s86
    %p88 = scmp.eq.s32.totalorder %s15, 0
    %p89 = por %p87, %p88
    %s90 = ssub.s32 %s9, %s16
    %p91 = scmp.eq.s32.totalorder %s90, 0
    %s93 = sadd.s32 %s92, 1
    %s94 = scalar_select %p91, %s92, %s93
    %p97 = pneg %p91
    %p98 = scmp.eq.s32.totalorder %s9, 3
    %p99 = por %p97, %p98
    %p100 = scmp.ne.s32.totalorder %s92, %s95
    %p101 = scmp.eq.s32.totalorder %s9, 0
    %p102 = por %p100, %p101
    %p103 = scmp.ne.s32.totalorder %s92, %s95
    %p104 = scmp.eq.s32.totalorder %s14, 3
    %p105 = por %p103, %p104
    %p106 = scmp.ne.s32.totalorder %s95, %s96
    %p107 = scmp.eq.s32.totalorder %s14, 0
    %p108 = por %p106, %p107
    %p109 = scmp.ne.s32.totalorder %s95, %s96
    %p110 = scmp.eq.s32.totalorder %s15, 3
    %p111 = por %p109, %p110
    %p113 = scmp.ne.s32.totalorder %s96, %s112
    %p114 = scmp.eq.s32.totalorder %s15, 0
    %p115 = por %p113, %p114
    %p116 = scmp.le.s32.totalorder 1, %s9
    %p117 = scmp.lt.s32.totalorder %s9, 5
    %p118 = pnand %p116, %p117
    %p119 = pneg %p118
    // Predicated region
    $region9: #{decoder_forward.6} parent=5 // pred_check
      _
    $region10: #{decoder_forward.6} parent=5 // pred_check_branch
      %121 = sbr.rel (%p118) target = $region12
    $region11: #{decoder_forward.6} parent=5 // pred_region
      %s122 = ssub.s32 %s9, 1
      // Predicated region
      $region13: #{decoder_forward.6} parent=11 // pred_check
        %p123 = pneg %p82
      $region14: #{decoder_forward.6} parent=11 // pred_check_branch
        %125 = sbr.rel (%p123) target = $region16
      $region15: #{decoder_forward.6} parent=11 // pred_region
        _
      $region16: #{decoder_forward.6} parent=11 // pred_fallthru
        _
    $region12: #{decoder_forward.6} parent=5 // pred_fallthru
      _
    %p126 = scmp.lt.s32.totalorder %s9, 4
    // Predicated region
    $region17: #{decoder_forward.6} parent=5 // pred_check
      %p127 = pneg %p126
    $region18: #{decoder_forward.6} parent=5 // pred_check_branch
      %129 = sbr.rel (%p127) target = $region20
    $region19: #{decoder_forward.6} parent=5 // pred_region
      // Predicated region
      $region21: #{decoder_forward.6} parent=19 // pred_check
        %p130 = pneg %p29
      $region22: #{decoder_forward.6} parent=19 // pred_check_branch
        %132 = sbr.rel (%p130) target = $region24
      $region23: #{decoder_forward.6} parent=19 // pred_region
        %p133 = scmp.lt.s32.totalorder %s9, 3
        %s134 = scalar_select %p133, %s9, 3
        %s135 = smul.addr %s134, 4
        %s136 = scalar_lea.vmem %s0, %s135
      $region24: #{decoder_forward.6} parent=19 // pred_fallthru
        _
      // Predicated region
      $region25: #{decoder_forward.6} parent=19 // pred_check
        %p137 = pneg %p55
      $region26: #{decoder_forward.6} parent=19 // pred_check_branch
        %139 = sbr.rel (%p137) target = $region28
      $region27: #{decoder_forward.6} parent=19 // pred_region
        %p140 = scmp.lt.s32.totalorder %s9, 3
        %s141 = scalar_select %p140, %s9, 3
        %s142 = smul.addr %s141, 16
        %s143 = smul.addr %s142, 4
        %s144 = scalar_lea.vmem %s1, %s143
      $region28: #{decoder_forward.6} parent=19 // pred_fallthru
        _
    $region20: #{decoder_forward.6} parent=5 // pred_fallthru
      _
    %p145 = scmp.le.s32.totalorder 1, %s9
    %p146 = scmp.lt.s32.totalorder %s9, 5
    %p147 = pnand %p145, %p146
    %p148 = pneg %p147
    // Predicated region
    $region29: #{decoder_forward.6} parent=5 // pred_check
      _
    $region30: #{decoder_forward.6} parent=5 // pred_check_branch
      %150 = sbr.rel (%p147) target = $region32
    $region31: #{decoder_forward.6} parent=5 // pred_region
      %s151 = ssub.s32 %s9, 1
      %p152 = scmp.lt.s32.totalorder %s14, 3
      %s153 = scalar_select %p152, %s14, 3
      %s154 = smul.addr %s153, 4
      %s155 = scalar_lea.vmem %s0, %s154
      %p156 = pneg %p35
      %p157 = pneg %p32
      %p158 = scmp.lt.s32.totalorder %s14, 3
      %s159 = scalar_select %p158, %s14, 3
      %s160 = smul.addr %s159, 16
      %s161 = smul.addr %s160, 4
      %s162 = scalar_lea.vmem %s1, %s161
      %p163 = pneg %p61
      %p164 = pneg %p58
      %p165 = pneg %p82
      %p166 = pneg %p79
      %p167 = pneg %p108
      %p168 = pneg %p105
      %p169 = scmp.lt.s32.totalorder %s14, 3
      %s170 = scalar_select %p169, %s14, 3
      %s171 = smul.addr %s170, 8
      %s172 = scalar_lea.vmem %s3, %s171
      %p173 = scmp.lt.s32.totalorder %s14, 3
      %s174 = scalar_select %p173, %s14, 3
      %s175 = smul.addr %s174, 4
      %s176 = scalar_lea.vmem %s0, %s175
      %p177 = scmp.lt.s32.totalorder %s14, 3
      %s178 = scalar_select %p177, %s14, 3
      %s179 = smul.addr %s178, 16
      %s180 = smul.addr %s179, 4
      %s181 = scalar_lea.vmem %s1, %s180
      %p182 = scmp.lt.s32.totalorder %s14, 3
      %s183 = scalar_select %p182, %s14, 3
      %s184 = smul.addr %s183, 8
      %s185 = scalar_lea.vmem %s3, %s184
      %v186 = vld [vmem:[%s176] sm:$0xf]
      %v187 = vld [vmem:[%s181] sm:$0xf]
      %v188 = vld [vmem:[%s181 + $0x4] sm:$0xf]
      %v189 = vld [vmem:[%s181 + $0x8] sm:$0xf]
      %v190 = vld [vmem:[%s181 + $0xc] sm:$0xf]
      %v191 = vld [vmem:[%s181 + $0x10] sm:$0xf]
      %v192 = vld [vmem:[%s181 + $0x14] sm:$0xf]
      %v193 = vld [vmem:[%s181 + $0x18] sm:$0xf]
      %v194 = vld [vmem:[%s181 + $0x1c] sm:$0xf]
      %v195 = vld [vmem:[%s181 + $0x20] sm:$0xf]
      %v196 = vld [vmem:[%s181 + $0x24] sm:$0xf]
      %v197 = vld [vmem:[%s181 + $0x28] sm:$0xf]
      %v198 = vld [vmem:[%s181 + $0x2c] sm:$0xf]
      %v199 = vld [vmem:[%s181 + $0x30] sm:$0xf]
      %v200 = vld [vmem:[%s181 + $0x34] sm:$0xf]
      %v201 = vld [vmem:[%s181 + $0x38] sm:$0xf]
      %v202 = vld [vmem:[%s181 + $0x3c] sm:$0xf]
      %v203 = vld [vmem:[%s2] sm:$0x1]
      %v205 = vperm.slane %v203, 0
      %v223 = vunpack.c.l.b16 %v187
      %v224 = vunpack.c.l.b16 %v188
      %v225 = vunpack.c.l.b16 %v189
      %v226 = vunpack.c.l.b16 %v190
      %v227 = vunpack.c.l.b16 %v191
      %v228 = vunpack.c.l.b16 %v192
      %v229 = vunpack.c.l.b16 %v193
      %v230 = vunpack.c.l.b16 %v194
      %v231 = vunpack.c.l.b16 %v195
      %v232 = vunpack.c.l.b16 %v196
      %v233 = vunpack.c.l.b16 %v197
      %v234 = vunpack.c.l.b16 %v198
      %v235 = vunpack.c.l.b16 %v199
      %v236 = vunpack.c.l.b16 %v200
      %v237 = vunpack.c.l.b16 %v201
      %v238 = vunpack.c.l.b16 %v202
      %v239 = vpack.c.b16 %v224, %v223
      %v240 = vpack.c.b16 %v226, %v225
      %v241 = vpack.c.b16 %v228, %v227
      %v242 = vpack.c.b16 %v230, %v229
      %v243 = vpack.c.b16 %v232, %v231
      %v244 = vpack.c.b16 %v234, %v233
      %v245 = vpack.c.b16 %v236, %v235
      %v246 = vpack.c.b16 %v238, %v237
      %255 = vmatpush.bf16.msra.mxu0 %v246
      %256 = vmatpush.bf16.msra.mxu0 %v245
      %257 = vmatpush.bf16.msra.mxu0 %v244
      %258 = vmatpush.bf16.msra.mxu0 %v243
      %259 = vmatpush.bf16.msra.mxu0 %v242
      %260 = vmatpush.bf16.msra.mxu0 %v241
      %261 = vmatpush.bf16.msra.mxu0 %v240
      %262 = vmatpush.bf16.msra.mxu0 %v239
      %263 = vmatmul.bf16.gmra.mxu0 %v186
      %v264 = vpop.f32.mrf.mxu0
      %v265 = vadd.f32 %v205, %v264
      %v266 = vpop.f32.mrf.mxu0
      %267 = vdwg.mxu0
      %v268 = vmax.f32 %v265, 0.0
      %269 = vst [vmem:[%s185] sm:$0xff] %v268
      %p270 = scmp.lt.s32.totalorder %s14, 3
      %s271 = scalar_select %p270, %s14, 3
      %s272 = smul.addr %s271, 8
      %s273 = scalar_lea.vmem %s3, %s272
      // Predicated region
      $region33: #{decoder_forward.6} parent=31 // pred_check
        %p274 = pneg %p105
      $region34: #{decoder_forward.6} parent=31 // pred_check_branch
        %276 = sbr.rel (%p274) target = $region36
      $region35: #{decoder_forward.6} parent=31 // pred_region
        _
      $region36: #{decoder_forward.6} parent=31 // pred_fallthru
        _
    $region32: #{decoder_forward.6} parent=5 // pred_fallthru
      _
    %p277 = scmp.le.s32.totalorder 2, %s9
    // Predicated region
    $region37: #{decoder_forward.6} parent=5 // pred_check
      %p278 = pneg %p277
    $region38: #{decoder_forward.6} parent=5 // pred_check_branch
      %280 = sbr.rel (%p278) target = $region40
    $region39: #{decoder_forward.6} parent=5 // pred_region
      %s281 = ssub.s32 %s9, 2
      // Predicated region
      $region41: #{decoder_forward.6} parent=39 // pred_check
        %p282 = pneg %p111
      $region42: #{decoder_forward.6} parent=39 // pred_check_branch
        %284 = sbr.rel (%p282) target = $region44
      $region43: #{decoder_forward.6} parent=39 // pred_region
        %p285 = scmp.lt.s32.totalorder %s15, 3
        %s286 = scalar_select %p285, %s15, 3
        %s287 = smul.addr %s286, 8
        %s288 = scalar_lea.vmem %s3, %s287
      $region44: #{decoder_forward.6} parent=39 // pred_fallthru
        _
    $region40: #{decoder_forward.6} parent=5 // pred_fallthru
      _
  $region6: #{decoder_forward.6} parent=0 // loop_footer
    %s13 = sadd.s32 1, %s9
  $region7: #{decoder_forward.6} parent=0 // loop_footer_branch
    %8 = sbr.rel target = $region3
  $region8: #{decoder_forward.6} parent=0 // loop_exit
    _

// kernel: decoder_forward.7
$region0: #{decoder_forward.7}
  #allocation0 [shape = 'u32[]', space=smem, size = 0x4, offset = 0x4, fixed_abs, tag = 'smem constant byte address 0x4 - core index']
  #allocation1 [shape = 'u32[72,128]{1,0:T(1,128)}', space=vmem, size = 0x9000, scoped, tag = 'internal scratch']
  %s0 = inlined_call_operand.vmem [shape: bf16[4,32,256], index: 0, kind: input, shape index: {}]
  %s1 = inlined_call_operand.vmem [shape: bf16[4,256,128], index: 1, kind: input, shape index: {}]
  %s2 = inlined_call_operand.vmem [shape: f32[1,128], index: 2, kind: input, shape index: {}]
  %s3 = inlined_call_operand.vmem [shape: f32[4,32,128], index: 3, kind: output, shape index: {}]
  %s4 = sld [smem:[#allocation0]]
  $region45: #{decoder_forward.7} parent=0
    _
  %s6 = ssub.s32 1, %s4
  %s7 = scalar_select 0, %s6, %s4
  loop: start=0, step=1, limit=6
  $region2: #{decoder_forward.7} parent=0 // loop_pre_header
    _
  $region3: #{decoder_forward.7} parent=0 // loop_header
    %s9 = sphi 0, %s13
    %p10 = scmp.ge.s32.totalorder %s9, 6
    %s19 = sphi 0, %s21
    %s22 = sphi 0, %s19
    %s23 = sphi 0, %s22
    %s39 = sphi 0, %s23
    %s45 = sphi 0, %s47
    %s48 = sphi 0, %s45
    %s49 = sphi 0, %s48
    %s65 = sphi 0, %s49
    %s69 = sphi 0, %s69
    %s71 = sphi 0, %s69
    %s72 = sphi 0, %s71
    %s86 = sphi 0, %s72
    %s92 = sphi 0, %s94
    %s95 = sphi 0, %s92
    %s96 = sphi 0, %s95
    %s112 = sphi 0, %s96
  $region4: #{decoder_forward.7} parent=0 // loop_header_branch
    %12 = sbr.rel (%p10) target = $region8
  $region5: #{decoder_forward.7} parent=0 // loop_body
    %s14 = ssub.s32 %s9, 1
    %s15 = ssub.s32 %s9, 2
    %s16 = sadd.s32 %s9, 1
    %s17 = ssub.s32 %s9, %s16
    %p18 = scmp.eq.s32.totalorder %s17, 0
    %s20 = sadd.s32 %s19, 1
    %s21 = scalar_select %p18, %s19, %s20
    %p24 = pneg %p18
    %p25 = scmp.eq.s32.totalorder %s9, 3
    %p26 = por %p24, %p25
    %p27 = scmp.ne.s32.totalorder %s19, %s22
    %p28 = scmp.eq.s32.totalorder %s9, 0
    %p29 = por %p27, %p28
    %p30 = scmp.ne.s32.totalorder %s19, %s22
    %p31 = scmp.eq.s32.totalorder %s14, 3
    %p32 = por %p30, %p31
    %p33 = scmp.ne.s32.totalorder %s22, %s23
    %p34 = scmp.eq.s32.totalorder %s14, 0
    %p35 = por %p33, %p34
    %p36 = scmp.ne.s32.totalorder %s22, %s23
    %p37 = scmp.eq.s32.totalorder %s15, 3
    %p38 = por %p36, %p37
    %p40 = scmp.ne.s32.totalorder %s23, %s39
    %p41 = scmp.eq.s32.totalorder %s15, 0
    %p42 = por %p40, %p41
    %s43 = ssub.s32 %s9, %s16
    %p44 = scmp.eq.s32.totalorder %s43, 0
    %s46 = sadd.s32 %s45, 1
    %s47 = scalar_select %p44, %s45, %s46
    %p50 = pneg %p44
    %p51 = scmp.eq.s32.totalorder %s9, 3
    %p52 = por %p50, %p51
    %p53 = scmp.ne.s32.totalorder %s45, %s48
    %p54 = scmp.eq.s32.totalorder %s9, 0
    %p55 = por %p53, %p54
    %p56 = scmp.ne.s32.totalorder %s45, %s48
    %p57 = scmp.eq.s32.totalorder %s14, 3
    %p58 = por %p56, %p57
    %p59 = scmp.ne.s32.totalorder %s48, %s49
    %p60 = scmp.eq.s32.totalorder %s14, 0
    %p61 = por %p59, %p60
    %p62 = scmp.ne.s32.totalorder %s48, %s49
    %p63 = scmp.eq.s32.totalorder %s15, 3
    %p64 = por %p62, %p63
    %p66 = scmp.ne.s32.totalorder %s49, %s65
    %p67 = scmp.eq.s32.totalorder %s15, 0
    %p68 = por %p66, %p67
    %s70 = sadd.s32 %s69, 1
    %p73 = scmp.eq.s32.totalorder %s9, 3
    %p74 = scmp.ne.s32.totalorder %s69, %s71
    %p75 = scmp.eq.s32.totalorder %s9, 0
    %p76 = por %p74, %p75
    %p77 = scmp.ne.s32.totalorder %s69, %s71
    %p78 = scmp.eq.s32.totalorder %s14, 3
    %p79 = por %p77, %p78
    %p80 = scmp.ne.s32.totalorder %s71, %s72
    %p81 = scmp.eq.s32.totalorder %s14, 0
    %p82 = por %p80, %p81
    %p83 = scmp.ne.s32.totalorder %s71, %s72
    %p84 = scmp.eq.s32.totalorder %s15, 3
    %p85 = por %p83, %p84
    %p87 = scmp.ne.s32.totalorder %s72, %s86
    %p88 = scmp.eq.s32.totalorder %s15, 0
    %p89 = por %p87, %p88
    %s90 = ssub.s32 %s9, %s16
    %p91 = scmp.eq.s32.totalorder %s90, 0
    %s93 = sadd.s32 %s92, 1
    %s94 = scalar_select %p91, %s92, %s93
    %p97 = pneg %p91
    %p98 = scmp.eq.s32.totalorder %s9, 3
    %p99 = por %p97, %p98
    %p100 = scmp.ne.s32.totalorder %s92, %s95
    %p101 = scmp.eq.s32.totalorder %s9, 0
    %p102 = por %p100, %p101
    %p103 = scmp.ne.s32.totalorder %s92, %s95
    %p104 = scmp.eq.s32.totalorder %s14, 3
    %p105 = por %p103, %p104
    %p106 = scmp.ne.s32.totalorder %s95, %s96
    %p107 = scmp.eq.s32.totalorder %s14, 0
    %p108 = por %p106, %p107
    %p109 = scmp.ne.s32.totalorder %s95, %s96
    %p110 = scmp.eq.s32.totalorder %s15, 3
    %p111 = por %p109, %p110
    %p113 = scmp.ne.s32.totalorder %s96, %s112
    %p114 = scmp.eq.s32.totalorder %s15, 0
    %p115 = por %p113, %p114
    %p116 = scmp.le.s32.totalorder 1, %s9
    %p117 = scmp.lt.s32.totalorder %s9, 5
    %p118 = pnand %p116, %p117
    %p119 = pneg %p118
    // Predicated region
    $region9: #{decoder_forward.7} parent=5 // pred_check
      _
    $region10: #{decoder_forward.7} parent=5 // pred_check_branch
      %121 = sbr.rel (%p118) target = $region12
    $region11: #{decoder_forward.7} parent=5 // pred_region
      %s122 = ssub.s32 %s9, 1
      // Predicated region
      $region13: #{decoder_forward.7} parent=11 // pred_check
        %p123 = pneg %p82
      $region14: #{decoder_forward.7} parent=11 // pred_check_branch
        %125 = sbr.rel (%p123) target = $region16
      $region15: #{decoder_forward.7} parent=11 // pred_region
        _
      $region16: #{decoder_forward.7} parent=11 // pred_fallthru
        _
    $region12: #{decoder_forward.7} parent=5 // pred_fallthru
      _
    %p126 = scmp.lt.s32.totalorder %s9, 4
    // Predicated region
    $region17: #{decoder_forward.7} parent=5 // pred_check
      %p127 = pneg %p126
    $region18: #{decoder_forward.7} parent=5 // pred_check_branch
      %129 = sbr.rel (%p127) target = $region20
    $region19: #{decoder_forward.7} parent=5 // pred_region
      // Predicated region
      $region21: #{decoder_forward.7} parent=19 // pred_check
        %p130 = pneg %p29
      $region22: #{decoder_forward.7} parent=19 // pred_check_branch
        %132 = sbr.rel (%p130) target = $region24
      $region23: #{decoder_forward.7} parent=19 // pred_region
        %p133 = scmp.lt.s32.totalorder %s9, 3
        %s134 = scalar_select %p133, %s9, 3
        %s135 = smul.addr %s134, 8
        %s136 = smul.addr %s135, 4
        %s137 = scalar_lea.vmem %s0, %s136
      $region24: #{decoder_forward.7} parent=19 // pred_fallthru
        _
      // Predicated region
      $region25: #{decoder_forward.7} parent=19 // pred_check
        %p138 = pneg %p55
      $region26: #{decoder_forward.7} parent=19 // pred_check_branch
        %140 = sbr.rel (%p138) target = $region28
      $region27: #{decoder_forward.7} parent=19 // pred_region
        %p141 = scmp.lt.s32.totalorder %s9, 3
        %s142 = scalar_select %p141, %s9, 3
        %s143 = smul.addr %s142, 32
        %s144 = smul.addr %s143, 4
        %s145 = scalar_lea.vmem %s1, %s144
      $region28: #{decoder_forward.7} parent=19 // pred_fallthru
        _
    $region20: #{decoder_forward.7} parent=5 // pred_fallthru
      _
    %p146 = scmp.le.s32.totalorder 1, %s9
    %p147 = scmp.lt.s32.totalorder %s9, 5
    %p148 = pnand %p146, %p147
    %p149 = pneg %p148
    // Predicated region
    $region29: #{decoder_forward.7} parent=5 // pred_check
      _
    $region30: #{decoder_forward.7} parent=5 // pred_check_branch
      %151 = sbr.rel (%p148) target = $region32
    $region31: #{decoder_forward.7} parent=5 // pred_region
      %s152 = ssub.s32 %s9, 1
      %p153 = scmp.lt.s32.totalorder %s14, 3
      %s154 = scalar_select %p153, %s14, 3
      %s155 = smul.addr %s154, 8
      %s156 = smul.addr %s155, 4
      %s157 = scalar_lea.vmem %s0, %s156
      %p158 = pneg %p35
      %p159 = pneg %p32
      %p160 = scmp.lt.s32.totalorder %s14, 3
      %s161 = scalar_select %p160, %s14, 3
      %s162 = smul.addr %s161, 32
      %s163 = smul.addr %s162, 4
      %s164 = scalar_lea.vmem %s1, %s163
      %p165 = pneg %p61
      %p166 = pneg %p58
      %p167 = pneg %p82
      %p168 = pneg %p79
      %p169 = pneg %p108
      %p170 = pneg %p105
      %p171 = scmp.lt.s32.totalorder %s14, 3
      %s172 = scalar_select %p171, %s14, 3
      %s173 = smul.addr %s172, 4
      %s174 = smul.addr %s173, 8
      %s175 = scalar_lea.vmem %s3, %s174
      %p176 = scmp.lt.s32.totalorder %s14, 3
      %s177 = scalar_select %p176, %s14, 3
      %s178 = smul.addr %s177, 8
      %s179 = smul.addr %s178, 4
      %s180 = scalar_lea.vmem %s0, %s179
      %p181 = scmp.lt.s32.totalorder %s14, 3
      %s182 = scalar_select %p181, %s14, 3
      %s183 = smul.addr %s182, 32
      %s184 = smul.addr %s183, 4
      %s185 = scalar_lea.vmem %s1, %s184
      %p186 = scmp.lt.s32.totalorder %s14, 3
      %s187 = scalar_select %p186, %s14, 3
      %s188 = smul.addr %s187, 4
      %s189 = smul.addr %s188, 8
      %s190 = scalar_lea.vmem %s3, %s189
      %v191 = vld [vmem:[%s180] sm:$0xff]
      %v192 = vld [vmem:[%s180 + $0x8] sm:$0xff]
      %v193 = vld [vmem:[%s180 + $0x10] sm:$0xff]
      %v194 = vld [vmem:[%s180 + $0x18] sm:$0xff]
      %v195 = vld [vmem:[%s185] sm:$0xf]
      %v196 = vld [vmem:[%s185 + $0x4] sm:$0xf]
      %v197 = vld [vmem:[%s185 + $0x8] sm:$0xf]
      %v198 = vld [vmem:[%s185 + $0xc] sm:$0xf]
      %v199 = vld [vmem:[%s185 + $0x10] sm:$0xf]
      %v200 = vld [vmem:[%s185 + $0x14] sm:$0xf]
      %v201 = vld [vmem:[%s185 + $0x18] sm:$0xf]
      %v202 = vld [vmem:[%s185 + $0x1c] sm:$0xf]
      %v203 = vld [vmem:[%s185 + $0x20] sm:$0xf]
      %v204 = vld [vmem:[%s185 + $0x24] sm:$0xf]
      %v205 = vld [vmem:[%s185 + $0x28] sm:$0xf]
      %v206 = vld [vmem:[%s185 + $0x2c] sm:$0xf]
      %v207 = vld [vmem:[%s185 + $0x30] sm:$0xf]
      %v208 = vld [vmem:[%s185 + $0x34] sm:$0xf]
      %v209 = vld [vmem:[%s185 + $0x38] sm:$0xf]
      %v210 = vld [vmem:[%s185 + $0x3c] sm:$0xf]
      %v211 = vld [vmem:[%s185 + $0x40] sm:$0xf]
      %v212 = vld [vmem:[%s185 + $0x44] sm:$0xf]
      %v213 = vld [vmem:[%s185 + $0x48] sm:$0xf]
      %v214 = vld [vmem:[%s185 + $0x4c] sm:$0xf]
      %v215 = vld [vmem:[%s185 + $0x50] sm:$0xf]
      %v216 = vld [vmem:[%s185 + $0x54] sm:$0xf]
      %v217 = vld [vmem:[%s185 + $0x58] sm:$0xf]
      %v218 = vld [vmem:[%s185 + $0x5c] sm:$0xf]
      %v219 = vld [vmem:[%s185 + $0x60] sm:$0xf]
      %v220 = vld [vmem:[%s185 + $0x64] sm:$0xf]
      %v221 = vld [vmem:[%s185 + $0x68] sm:$0xf]
      %v222 = vld [vmem:[%s185 + $0x6c] sm:$0xf]
      %v223 = vld [vmem:[%s185 + $0x70] sm:$0xf]
      %v224 = vld [vmem:[%s185 + $0x74] sm:$0xf]
      %v225 = vld [vmem:[%s185 + $0x78] sm:$0xf]
      %v226 = vld [vmem:[%s185 + $0x7c] sm:$0xf]
      %v227 = vld [vmem:[%s2] sm:$0x1]
      %v229 = vperm.slane %v227, 0
      %v235 = vunpack.c.l.b16 %v191
      %v236 = vunpack.c.h.b16 %v191
      %v237 = vunpack.c.l.b16 %v192
      %v238 = vunpack.c.h.b16 %v192
      %v239 = vunpack.c.l.b16 %v193
      %v240 = vunpack.c.h.b16 %v193
      %v241 = vunpack.c.l.b16 %v194
      %v242 = vunpack.c.h.b16 %v194
      %v243 = vpack.c.b16 %v237, %v235
      %v244 = vpack.c.b16 %v238, %v236
      %v245 = vpack.c.b16 %v241, %v239
      %v246 = vpack.c.b16 %v242, %v240
      %v283 = vunpack.c.l.b16 %v195
      %v284 = vunpack.c.l.b16 %v196
      %v285 = vunpack.c.l.b16 %v197
      %v286 = vunpack.c.l.b16 %v198
      %v287 = vunpack.c.l.b16 %v199
      %v288 = vunpack.c.l.b16 %v200
      %v289 = vunpack.c.l.b16 %v201
      %v290 = vunpack.c.l.b16 %v202
      %v291 = vunpack.c.l.b16 %v203
      %v292 = vunpack.c.l.b16 %v204
      %v293 = vunpack.c.l.b16 %v205
      %v294 = vunpack.c.l.b16 %v206
      %v295 = vunpack.c.l.b16 %v207
      %v296 = vunpack.c.l.b16 %v208
      %v297 = vunpack.c.l.b16 %v209
      %v298 = vunpack.c.l.b16 %v210
      %v299 = vunpack.c.l.b16 %v211
      %v300 = vunpack.c.l.b16 %v212
      %v301 = vunpack.c.l.b16 %v213
      %v302 = vunpack.c.l.b16 %v214
      %v303 = vunpack.c.l.b16 %v215
      %v304 = vunpack.c.l.b16 %v216
      %v305 = vunpack.c.l.b16 %v217
      %v306 = vunpack.c.l.b16 %v218
      %v307 = vunpack.c.l.b16 %v219
      %v308 = vunpack.c.l.b16 %v220
      %v309 = vunpack.c.l.b16 %v221
      %v310 = vunpack.c.l.b16 %v222
      %v311 = vunpack.c.l.b16 %v223
      %v312 = vunpack.c.l.b16 %v224
      %v313 = vunpack.c.l.b16 %v225
      %v314 = vunpack.c.l.b16 %v226
      %v315 = vpack.c.b16 %v284, %v283
      %v316 = vpack.c.b16 %v286, %v285
      %v317 = vpack.c.b16 %v288, %v287
      %v318 = vpack.c.b16 %v290, %v289
      %v319 = vpack.c.b16 %v292, %v291
      %v320 = vpack.c.b16 %v294, %v293
      %v321 = vpack.c.b16 %v296, %v295
      %v322 = vpack.c.b16 %v298, %v297
      %v323 = vpack.c.b16 %v300, %v299
      %v324 = vpack.c.b16 %v302, %v301
      %v325 = vpack.c.b16 %v304, %v303
      %v326 = vpack.c.b16 %v306, %v305
      %v327 = vpack.c.b16 %v308, %v307
      %v328 = vpack.c.b16 %v310, %v309
      %v329 = vpack.c.b16 %v312, %v311
      %v330 = vpack.c.b16 %v314, %v313
      %347 = vmatpush.bf16.msra.mxu0 %v322
      %348 = vmatpush.bf16.msra.mxu0 %v321
      %349 = vmatpush.bf16.msra.mxu0 %v320
      %350 = vmatpush.bf16.msra.mxu0 %v319
      %351 = vmatpush.bf16.msra.mxu0 %v318
      %352 = vmatpush.bf16.msra.mxu0 %v317
      %353 = vmatpush.bf16.msra.mxu0 %v316
      %354 = vmatpush.bf16.msra.mxu0 %v315
      %355 = vmatmul.bf16.gmra.mxu0 %v243
      %v356 = vpop.f32.mrf.mxu0
      %v357 = vadd.f32 %v229, %v356
      %v358 = vpop.f32.mrf.mxu0
      %v359 = vadd.f32 %v229, %v358
      %360 = vmatmul.bf16.gmra.mxu0 %v245
      %v361 = vpop.f32.mrf.mxu0
      %v362 = vadd.f32 %v229, %v361
      %v363 = vpop.f32.mrf.mxu0
      %v364 = vadd.f32 %v229, %v363
      %365 = vdwg.mxu0
      %366 = vmatpush.bf16.msra.mxu0 %v330
      %367 = vmatpush.bf16.msra.mxu0 %v329
      %368 = vmatpush.bf16.msra.mxu0 %v328
      %369 = vmatpush.bf16.msra.mxu0 %v327
      %370 = vmatpush.bf16.msra.mxu0 %v326
      %371 = vmatpush.bf16.msra.mxu0 %v325
      %372 = vmatpush.bf16.msra.mxu0 %v324
      %373 = vmatpush.bf16.msra.mxu0 %v323
      %374 = vmatmul.bf16.gmra.mxu0 %v244
      %v375 = vpop.f32.mrf.mxu0
      %v376 = vadd.f32 %v357, %v375
      %v377 = vpop.f32.mrf.mxu0
      %v378 = vadd.f32 %v359, %v377
      %379 = vmatmul.bf16.gmra.mxu0 %v246
      %v380 = vpop.f32.mrf.mxu0
      %v381 = vadd.f32 %v362, %v380
      %v382 = vpop.f32.mrf.mxu0
      %v383 = vadd.f32 %v364, %v382
      %384 = vdwg.mxu0
      %v385 = vmax.f32 %v376, 0.0
      %v386 = vmax.f32 %v378, 0.0
      %v387 = vmax.f32 %v381, 0.0
      %v388 = vmax.f32 %v383, 0.0
      %389 = vst [vmem:[%s190] sm:$0xff] %v385
      %390 = vst [vmem:[%s190 + $0x8] sm:$0xff] %v386
      %391 = vst [vmem:[%s190 + $0x10] sm:$0xff] %v387
      %392 = vst [vmem:[%s190 + $0x18] sm:$0xff] %v388
      %p393 = scmp.lt.s32.totalorder %s14, 3
      %s394 = scalar_select %p393, %s14, 3
      %s395 = smul.addr %s394, 4
      %s396 = smul.addr %s395, 8
      %s397 = scalar_lea.vmem %s3, %s396
      // Predicated region
      $region33: #{decoder_forward.7} parent=31 // pred_check
        %p398 = pneg %p105
      $region34: #{decoder_forward.7} parent=31 // pred_check_branch
        %400 = sbr.rel (%p398) target = $region36
      $region35: #{decoder_forward.7} parent=31 // pred_region
        _
      $region36: #{decoder_forward.7} parent=31 // pred_fallthru
        _
    $region32: #{decoder_forward.7} parent=5 // pred_fallthru
      _
    %p401 = scmp.le.s32.totalorder 2, %s9
    // Predicated region
    $region37: #{decoder_forward.7} parent=5 // pred_check
      %p402 = pneg %p401
    $region38: #{decoder_forward.7} parent=5 // pred_check_branch
      %404 = sbr.rel (%p402) target = $region40
    $region39: #{decoder_forward.7} parent=5 // pred_region
      %s405 = ssub.s32 %s9, 2
      // Predicated region
      $region41: #{decoder_forward.7} parent=39 // pred_check
        %p406 = pneg %p111
      $region42: #{decoder_forward.7} parent=39 // pred_check_branch
        %408 = sbr.rel (%p406) target = $region44
      $region43: #{decoder_forward.7} parent=39 // pred_region
        %p409 = scmp.lt.s32.totalorder %s15, 3
        %s410 = scalar_select %p409, %s15, 3
        %s411 = smul.addr %s410, 4
        %s412 = smul.addr %s411, 8
        %s413 = scalar_lea.vmem %s3, %s412
      $region44: #{decoder_forward.7} parent=39 // pred_fallthru
        _
    $region40: #{decoder_forward.7} parent=5 // pred_fallthru
      _
  $region6: #{decoder_forward.7} parent=0 // loop_footer
    %s13 = sadd.s32 1, %s9
  $region7: #{decoder_forward.7} parent=0 // loop_footer_branch
    %8 = sbr.rel target = $region3
  $region8: #{decoder_forward.7} parent=0 // loop_exit
    _

// kernel: decoder_forward.8
$region0: #{decoder_forward.8}
  #allocation0 [shape = 'u32[]', space=smem, size = 0x4, offset = 0x4, fixed_abs, tag = 'smem constant byte address 0x4 - core index']
  #allocation1 [shape = 'u32[72,128]{1,0:T(1,128)}', space=vmem, size = 0x9000, scoped, tag = 'internal scratch']
  %s0 = inlined_call_operand.vmem [shape: bf16[4,128,512], index: 0, kind: input, shape index: {}]
  %s1 = inlined_call_operand.vmem [shape: bf16[4,512,128], index: 1, kind: input, shape index: {}]
  %s2 = inlined_call_operand.vmem [shape: f32[1,128], index: 2, kind: input, shape index: {}]
  %s3 = inlined_call_operand.vmem [shape: f32[4,128,128], index: 3, kind: output, shape index: {}]
  %s4 = sld [smem:[#allocation0]]
  $region45: #{decoder_forward.8} parent=0
    _
  %s6 = ssub.s32 1, %s4
  %s7 = scalar_select 0, %s6, %s4
  loop: start=0, step=1, limit=6
  $region2: #{decoder_forward.8} parent=0 // loop_pre_header
    _
  $region3: #{decoder_forward.8} parent=0 // loop_header
    %s9 = sphi 0, %s13
    %p10 = scmp.ge.s32.totalorder %s9, 6
    %s19 = sphi 0, %s21
    %s22 = sphi 0, %s19
    %s23 = sphi 0, %s22
    %s39 = sphi 0, %s23
    %s45 = sphi 0, %s47
    %s48 = sphi 0, %s45
    %s49 = sphi 0, %s48
    %s65 = sphi 0, %s49
    %s69 = sphi 0, %s69
    %s71 = sphi 0, %s69
    %s72 = sphi 0, %s71
    %s86 = sphi 0, %s72
    %s92 = sphi 0, %s94
    %s95 = sphi 0, %s92
    %s96 = sphi 0, %s95
    %s112 = sphi 0, %s96
  $region4: #{decoder_forward.8} parent=0 // loop_header_branch
    %12 = sbr.rel (%p10) target = $region8
  $region5: #{decoder_forward.8} parent=0 // loop_body
    %s14 = ssub.s32 %s9, 1
    %s15 = ssub.s32 %s9, 2
    %s16 = sadd.s32 %s9, 1
    %s17 = ssub.s32 %s9, %s16
    %p18 = scmp.eq.s32.totalorder %s17, 0
    %s20 = sadd.s32 %s19, 1
    %s21 = scalar_select %p18, %s19, %s20
    %p24 = pneg %p18
    %p25 = scmp.eq.s32.totalorder %s9, 3
    %p26 = por %p24, %p25
    %p27 = scmp.ne.s32.totalorder %s19, %s22
    %p28 = scmp.eq.s32.totalorder %s9, 0
    %p29 = por %p27, %p28
    %p30 = scmp.ne.s32.totalorder %s19, %s22
    %p31 = scmp.eq.s32.totalorder %s14, 3
    %p32 = por %p30, %p31
    %p33 = scmp.ne.s32.totalorder %s22, %s23
    %p34 = scmp.eq.s32.totalorder %s14, 0
    %p35 = por %p33, %p34
    %p36 = scmp.ne.s32.totalorder %s22, %s23
    %p37 = scmp.eq.s32.totalorder %s15, 3
    %p38 = por %p36, %p37
    %p40 = scmp.ne.s32.totalorder %s23, %s39
    %p41 = scmp.eq.s32.totalorder %s15, 0
    %p42 = por %p40, %p41
    %s43 = ssub.s32 %s9, %s16
    %p44 = scmp.eq.s32.totalorder %s43, 0
    %s46 = sadd.s32 %s45, 1
    %s47 = scalar_select %p44, %s45, %s46
    %p50 = pneg %p44
    %p51 = scmp.eq.s32.totalorder %s9, 3
    %p52 = por %p50, %p51
    %p53 = scmp.ne.s32.totalorder %s45, %s48
    %p54 = scmp.eq.s32.totalorder %s9, 0
    %p55 = por %p53, %p54
    %p56 = scmp.ne.s32.totalorder %s45, %s48
    %p57 = scmp.eq.s32.totalorder %s14, 3
    %p58 = por %p56, %p57
    %p59 = scmp.ne.s32.totalorder %s48, %s49
    %p60 = scmp.eq.s32.totalorder %s14, 0
    %p61 = por %p59, %p60
    %p62 = scmp.ne.s32.totalorder %s48, %s49
    %p63 = scmp.eq.s32.totalorder %s15, 3
    %p64 = por %p62, %p63
    %p66 = scmp.ne.s32.totalorder %s49, %s65
    %p67 = scmp.eq.s32.totalorder %s15, 0
    %p68 = por %p66, %p67
    %s70 = sadd.s32 %s69, 1
    %p73 = scmp.eq.s32.totalorder %s9, 3
    %p74 = scmp.ne.s32.totalorder %s69, %s71
    %p75 = scmp.eq.s32.totalorder %s9, 0
    %p76 = por %p74, %p75
    %p77 = scmp.ne.s32.totalorder %s69, %s71
    %p78 = scmp.eq.s32.totalorder %s14, 3
    %p79 = por %p77, %p78
    %p80 = scmp.ne.s32.totalorder %s71, %s72
    %p81 = scmp.eq.s32.totalorder %s14, 0
    %p82 = por %p80, %p81
    %p83 = scmp.ne.s32.totalorder %s71, %s72
    %p84 = scmp.eq.s32.totalorder %s15, 3
    %p85 = por %p83, %p84
    %p87 = scmp.ne.s32.totalorder %s72, %s86
    %p88 = scmp.eq.s32.totalorder %s15, 0
    %p89 = por %p87, %p88
    %s90 = ssub.s32 %s9, %s16
    %p91 = scmp.eq.s32.totalorder %s90, 0
    %s93 = sadd.s32 %s92, 1
    %s94 = scalar_select %p91, %s92, %s93
    %p97 = pneg %p91
    %p98 = scmp.eq.s32.totalorder %s9, 3
    %p99 = por %p97, %p98
    %p100 = scmp.ne.s32.totalorder %s92, %s95
    %p101 = scmp.eq.s32.totalorder %s9, 0
    %p102 = por %p100, %p101
    %p103 = scmp.ne.s32.totalorder %s92, %s95
    %p104 = scmp.eq.s32.totalorder %s14, 3
    %p105 = por %p103, %p104
    %p106 = scmp.ne.s32.totalorder %s95, %s96
    %p107 = scmp.eq.s32.totalorder %s14, 0
    %p108 = por %p106, %p107
    %p109 = scmp.ne.s32.totalorder %s95, %s96
    %p110 = scmp.eq.s32.totalorder %s15, 3
    %p111 = por %p109, %p110
    %p113 = scmp.ne.s32.totalorder %s96, %s112
    %p114 = scmp.eq.s32.totalorder %s15, 0
    %p115 = por %p113, %p114
    %p116 = scmp.le.s32.totalorder 1, %s9
    %p117 = scmp.lt.s32.totalorder %s9, 5
    %p118 = pnand %p116, %p117
    %p119 = pneg %p118
    // Predicated region
    $region9: #{decoder_forward.8} parent=5 // pred_check
      _
    $region10: #{decoder_forward.8} parent=5 // pred_check_branch
      %121 = sbr.rel (%p118) target = $region12
    $region11: #{decoder_forward.8} parent=5 // pred_region
      %s122 = ssub.s32 %s9, 1
      // Predicated region
      $region13: #{decoder_forward.8} parent=11 // pred_check
        %p123 = pneg %p82
      $region14: #{decoder_forward.8} parent=11 // pred_check_branch
        %125 = sbr.rel (%p123) target = $region16
      $region15: #{decoder_forward.8} parent=11 // pred_region
        _
      $region16: #{decoder_forward.8} parent=11 // pred_fallthru
        _
    $region12: #{decoder_forward.8} parent=5 // pred_fallthru
      _
    %p126 = scmp.lt.s32.totalorder %s9, 4
    // Predicated region
    $region17: #{decoder_forward.8} parent=5 // pred_check
      %p127 = pneg %p126
    $region18: #{decoder_forward.8} parent=5 // pred_check_branch
      %129 = sbr.rel (%p127) target = $region20
    $region19: #{decoder_forward.8} parent=5 // pred_region
      // Predicated region
      $region21: #{decoder_forward.8} parent=19 // pred_check
        %p130 = pneg %p29
      $region22: #{decoder_forward.8} parent=19 // pred_check_branch
        %132 = sbr.rel (%p130) target = $region24
      $region23: #{decoder_forward.8} parent=19 // pred_region
        %p133 = scmp.lt.s32.totalorder %s9, 3
        %s134 = scalar_select %p133, %s9, 3
        %s135 = smul.addr %s134, 64
        %s136 = smul.addr %s135, 4
        %s137 = scalar_lea.vmem %s0, %s136
      $region24: #{decoder_forward.8} parent=19 // pred_fallthru
        _
      // Predicated region
      $region25: #{decoder_forward.8} parent=19 // pred_check
        %p138 = pneg %p55
      $region26: #{decoder_forward.8} parent=19 // pred_check_branch
        %140 = sbr.rel (%p138) target = $region28
      $region27: #{decoder_forward.8} parent=19 // pred_region
        %p141 = scmp.lt.s32.totalorder %s9, 3
        %s142 = scalar_select %p141, %s9, 3
        %s143 = smul.addr %s142, 64
        %s144 = smul.addr %s143, 4
        %s145 = scalar_lea.vmem %s1, %s144
      $region28: #{decoder_forward.8} parent=19 // pred_fallthru
        _
    $region20: #{decoder_forward.8} parent=5 // pred_fallthru
      _
    %p146 = scmp.le.s32.totalorder 1, %s9
    %p147 = scmp.lt.s32.totalorder %s9, 5
    %p148 = pnand %p146, %p147
    %p149 = pneg %p148
    // Predicated region
    $region29: #{decoder_forward.8} parent=5 // pred_check
      _
    $region30: #{decoder_forward.8} parent=5 // pred_check_branch
      %151 = sbr.rel (%p148) target = $region32
    $region31: #{decoder_forward.8} parent=5 // pred_region
      %s152 = ssub.s32 %s9, 1
      %p153 = scmp.lt.s32.totalorder %s14, 3
      %s154 = scalar_select %p153, %s14, 3
      %s155 = smul.addr %s154, 64
      %s156 = smul.addr %s155, 4
      %s157 = scalar_lea.vmem %s0, %s156
      %p158 = pneg %p35
      %p159 = pneg %p32
      %p160 = scmp.lt.s32.totalorder %s14, 3
      %s161 = scalar_select %p160, %s14, 3
      %s162 = smul.addr %s161, 64
      %s163 = smul.addr %s162, 4
      %s164 = scalar_lea.vmem %s1, %s163
      %p165 = pneg %p61
      %p166 = pneg %p58
      %p167 = pneg %p82
      %p168 = pneg %p79
      %p169 = pneg %p108
      %p170 = pneg %p105
      %p171 = scmp.lt.s32.totalorder %s14, 3
      %s172 = scalar_select %p171, %s14, 3
      %s173 = smul.addr %s172, 16
      %s174 = smul.addr %s173, 8
      %s175 = scalar_lea.vmem %s3, %s174
      %p176 = scmp.lt.s32.totalorder %s14, 3
      %s177 = scalar_select %p176, %s14, 3
      %s178 = smul.addr %s177, 64
      %s179 = smul.addr %s178, 4
      %s180 = scalar_lea.vmem %s0, %s179
      %p181 = scmp.lt.s32.totalorder %s14, 3
      %s182 = scalar_select %p181, %s14, 3
      %s183 = smul.addr %s182, 64
      %s184 = smul.addr %s183, 4
      %s185 = scalar_lea.vmem %s1, %s184
      %p186 = scmp.lt.s32.totalorder %s14, 3
      %s187 = scalar_select %p186, %s14, 3
      %s188 = smul.addr %s187, 16
      %s189 = smul.addr %s188, 8
      %s190 = scalar_lea.vmem %s3, %s189
      %v191 = vld [vmem:[%s180] sm:$0xff]
      %v192 = vld [vmem:[%s180 + $0x8] sm:$0xff]
      %v193 = vld [vmem:[%s180 + $0x10] sm:$0xff]
      %v194 = vld [vmem:[%s180 + $0x18] sm:$0xff]
      %v195 = vld [vmem:[%s180 + $0x20] sm:$0xff]
      %v196 = vld [vmem:[%s180 + $0x28] sm:$0xff]
      %v197 = vld [vmem:[%s180 + $0x30] sm:$0xff]
      %v198 = vld [vmem:[%s180 + $0x38] sm:$0xff]
      %v199 = vld [vmem:[%s180 + $0x40] sm:$0xff]
      %v200 = vld [vmem:[%s180 + $0x48] sm:$0xff]
      %v201 = vld [vmem:[%s180 + $0x50] sm:$0xff]
      %v202 = vld [vmem:[%s180 + $0x58] sm:$0xff]
      %v203 = vld [vmem:[%s180 + $0x60] sm:$0xff]
      %v204 = vld [vmem:[%s180 + $0x68] sm:$0xff]
      %v205 = vld [vmem:[%s180 + $0x70] sm:$0xff]
      %v206 = vld [vmem:[%s180 + $0x78] sm:$0xff]
      %v207 = vld [vmem:[%s180 + $0x80] sm:$0xff]
      %v208 = vld [vmem:[%s180 + $0x88] sm:$0xff]
      %v209 = vld [vmem:[%s180 + $0x90] sm:$0xff]
      %v210 = vld [vmem:[%s180 + $0x98] sm:$0xff]
      %v211 = vld [vmem:[%s180 + $0xa0] sm:$0xff]
      %v212 = vld [vmem:[%s180 + $0xa8] sm:$0xff]
      %v213 = vld [vmem:[%s180 + $0xb0] sm:$0xff]
      %v214 = vld [vmem:[%s180 + $0xb8] sm:$0xff]
      %v215 = vld [vmem:[%s180 + $0xc0] sm:$0xff]
      %v216 = vld [vmem:[%s180 + $0xc8] sm:$0xff]
      %v217 = vld [vmem:[%s180 + $0xd0] sm:$0xff]
      %v218 = vld [vmem:[%s180 + $0xd8] sm:$0xff]
      %v219 = vld [vmem:[%s180 + $0xe0] sm:$0xff]
      %v220 = vld [vmem:[%s180 + $0xe8] sm:$0xff]
      %v221 = vld [vmem:[%s180 + $0xf0] sm:$0xff]
      %v222 = vld [vmem:[%s180 + $0xf8] sm:$0xff]
      %v223 = vld [vmem:[%s185] sm:$0xf]
      %v224 = vld [vmem:[%s185 + $0x4] sm:$0xf]
      %v225 = vld [vmem:[%s185 + $0x8] sm:$0xf]
      %v226 = vld [vmem:[%s185 + $0xc] sm:$0xf]
      %v227 = vld [vmem:[%s185 + $0x10] sm:$0xf]
      %v228 = vld [vmem:[%s185 + $0x14] sm:$0xf]
      %v229 = vld [vmem:[%s185 + $0x18] sm:$0xf]
      %v230 = vld [vmem:[%s185 + $0x1c] sm:$0xf]
      %v231 = vld [vmem:[%s185 + $0x20] sm:$0xf]
      %v232 = vld [vmem:[%s185 + $0x24] sm:$0xf]
      %v233 = vld [vmem:[%s185 + $0x28] sm:$0xf]
      %v234 = vld [vmem:[%s185 + $0x2c] sm:$0xf]
      %v235 = vld [vmem:[%s185 + $0x30] sm:$0xf]
      %v236 = vld [vmem:[%s185 + $0x34] sm:$0xf]
      %v237 = vld [vmem:[%s185 + $0x38] sm:$0xf]
      %v238 = vld [vmem:[%s185 + $0x3c] sm:$0xf]
      %v239 = vld [vmem:[%s185 + $0x40] sm:$0xf]
      %v240 = vld [vmem:[%s185 + $0x44] sm:$0xf]
      %v241 = vld [vmem:[%s185 + $0x48] sm:$0xf]
      %v242 = vld [vmem:[%s185 + $0x4c] sm:$0xf]
      %v243 = vld [vmem:[%s185 + $0x50] sm:$0xf]
      %v244 = vld [vmem:[%s185 + $0x54] sm:$0xf]
      %v245 = vld [vmem:[%s185 + $0x58] sm:$0xf]
      %v246 = vld [vmem:[%s185 + $0x5c] sm:$0xf]
      %v247 = vld [vmem:[%s185 + $0x60] sm:$0xf]
      %v248 = vld [vmem:[%s185 + $0x64] sm:$0xf]
      %v249 = vld [vmem:[%s185 + $0x68] sm:$0xf]
      %v250 = vld [vmem:[%s185 + $0x6c] sm:$0xf]
      %v251 = vld [vmem:[%s185 + $0x70] sm:$0xf]
      %v252 = vld [vmem:[%s185 + $0x74] sm:$0xf]
      %v253 = vld [vmem:[%s185 + $0x78] sm:$0xf]
      %v254 = vld [vmem:[%s185 + $0x7c] sm:$0xf]
      %v255 = vld [vmem:[%s185 + $0x80] sm:$0xf]
      %v256 = vld [vmem:[%s185 + $0x84] sm:$0xf]
      %v257 = vld [vmem:[%s185 + $0x88] sm:$0xf]
      %v258 = vld [vmem:[%s185 + $0x8c] sm:$0xf]
      %v259 = vld [vmem:[%s185 + $0x90] sm:$0xf]
      %v260 = vld [vmem:[%s185 + $0x94] sm:$0xf]
      %v261 = vld [vmem:[%s185 + $0x98] sm:$0xf]
      %v262 = vld [vmem:[%s185 + $0x9c] sm:$0xf]
      %v263 = vld [vmem:[%s185 + $0xa0] sm:$0xf]
      %v264 = vld [vmem:[%s185 + $0xa4] sm:$0xf]
      %v265 = vld [vmem:[%s185 + $0xa8] sm:$0xf]
      %v266 = vld [vmem:[%s185 + $0xac] sm:$0xf]
      %v267 = vld [vmem:[%s185 + $0xb0] sm:$0xf]
      %v268 = vld [vmem:[%s185 + $0xb4] sm:$0xf]
      %v269 = vld [vmem:[%s185 + $0xb8] sm:$0xf]
      %v270 = vld [vmem:[%s185 + $0xbc] sm:$0xf]
      %v271 = vld [vmem:[%s185 + $0xc0] sm:$0xf]
      %v272 = vld [vmem:[%s185 + $0xc4] sm:$0xf]
      %v273 = vld [vmem:[%s185 + $0xc8] sm:$0xf]
      %v274 = vld [vmem:[%s185 + $0xcc] sm:$0xf]
      %v275 = vld [vmem:[%s185 + $0xd0] sm:$0xf]
      %v276 = vld [vmem:[%s185 + $0xd4] sm:$0xf]
      %v277 = vld [vmem:[%s185 + $0xd8] sm:$0xf]
      %v278 = vld [vmem:[%s185 + $0xdc] sm:$0xf]
      %v279 = vld [vmem:[%s185 + $0xe0] sm:$0xf]
      %v280 = vld [vmem:[%s185 + $0xe4] sm:$0xf]
      %v281 = vld [vmem:[%s185 + $0xe8] sm:$0xf]
      %v282 = vld [vmem:[%s185 + $0xec] sm:$0xf]
      %v283 = vld [vmem:[%s185 + $0xf0] sm:$0xf]
      %v284 = vld [vmem:[%s185 + $0xf4] sm:$0xf]
      %v285 = vld [vmem:[%s185 + $0xf8] sm:$0xf]
      %v286 = vld [vmem:[%s185 + $0xfc] sm:$0xf]
      %v287 = vld [vmem:[%s2] sm:$0x1]
      %v289 = vperm.slane %v287, 0
      %v323 = vunpack.c.l.b16 %v191
      %v324 = vunpack.c.h.b16 %v191
      %v325 = vunpack.c.l.b16 %v192
      %v326 = vunpack.c.h.b16 %v192
      %v327 = vunpack.c.l.b16 %v193
      %v328 = vunpack.c.h.b16 %v193
      %v329 = vunpack.c.l.b16 %v194
      %v330 = vunpack.c.h.b16 %v194
      %v331 = vunpack.c.l.b16 %v195
      %v332 = vunpack.c.h.b16 %v195
      %v333 = vunpack.c.l.b16 %v196
      %v334 = vunpack.c.h.b16 %v196
      %v335 = vunpack.c.l.b16 %v197
      %v336 = vunpack.c.h.b16 %v197
      %v337 = vunpack.c.l.b16 %v198
      %v338 = vunpack.c.h.b16 %v198
      %v339 = vunpack.c.l.b16 %v199
      %v340 = vunpack.c.h.b16 %v199
      %v341 = vunpack.c.l.b16 %v200
      %v342 = vunpack.c.h.b16 %v200
      %v343 = vunpack.c.l.b16 %v201
      %v344 = vunpack.c.h.b16 %v201
      %v345 = vunpack.c.l.b16 %v202
      %v346 = vunpack.c.h.b16 %v202
      %v347 = vunpack.c.l.b16 %v203
      %v348 = vunpack.c.h.b16 %v203
      %v349 = vunpack.c.l.b16 %v204
      %v350 = vunpack.c.h.b16 %v204
      %v351 = vunpack.c.l.b16 %v205
      %v352 = vunpack.c.h.b16 %v205
      %v353 = vunpack.c.l.b16 %v206
      %v354 = vunpack.c.h.b16 %v206
      %v355 = vunpack.c.l.b16 %v207
      %v356 = vunpack.c.h.b16 %v207
      %v357 = vunpack.c.l.b16 %v208
      %v358 = vunpack.c.h.b16 %v208
      %v359 = vunpack.c.l.b16 %v209
      %v360 = vunpack.c.h.b16 %v209
      %v361 = vunpack.c.l.b16 %v210
      %v362 = vunpack.c.h.b16 %v210
      %v363 = vunpack.c.l.b16 %v211
      %v364 = vunpack.c.h.b16 %v211
      %v365 = vunpack.c.l.b16 %v212
      %v366 = vunpack.c.h.b16 %v212
      %v367 = vunpack.c.l.b16 %v213
      %v368 = vunpack.c.h.b16 %v213
      %v369 = vunpack.c.l.b16 %v214
      %v370 = vunpack.c.h.b16 %v214
      %v371 = vunpack.c.l.b16 %v215
      %v372 = vunpack.c.h.b16 %v215
      %v373 = vunpack.c.l.b16 %v216
      %v374 = vunpack.c.h.b16 %v216
      %v375 = vunpack.c.l.b16 %v217
      %v376 = vunpack.c.h.b16 %v217
      %v377 = vunpack.c.l.b16 %v218
      %v378 = vunpack.c.h.b16 %v218
      %v379 = vunpack.c.l.b16 %v219
      %v380 = vunpack.c.h.b16 %v219
      %v381 = vunpack.c.l.b16 %v220
      %v382 = vunpack.c.h.b16 %v220
      %v383 = vunpack.c.l.b16 %v221
      %v384 = vunpack.c.h.b16 %v221
      %v385 = vunpack.c.l.b16 %v222
      %v386 = vunpack.c.h.b16 %v222
      %v387 = vpack.c.b16 %v327, %v323
      %v388 = vpack.c.b16 %v328, %v324
      %v389 = vpack.c.b16 %v329, %v325
      %v390 = vpack.c.b16 %v330, %v326
      %v391 = vpack.c.b16 %v335, %v331
      %v392 = vpack.c.b16 %v336, %v332
      %v393 = vpack.c.b16 %v337, %v333
      %v394 = vpack.c.b16 %v338, %v334
      %v395 = vpack.c.b16 %v343, %v339
      %v396 = vpack.c.b16 %v344, %v340
      %v397 = vpack.c.b16 %v345, %v341
      %v398 = vpack.c.b16 %v346, %v342
      %v399 = vpack.c.b16 %v351, %v347
      %v400 = vpack.c.b16 %v352, %v348
      %v401 = vpack.c.b16 %v353, %v349
      %v402 = vpack.c.b16 %v354, %v350
      %v403 = vpack.c.b16 %v359, %v355
      %v404 = vpack.c.b16 %v360, %v356
      %v405 = vpack.c.b16 %v361, %v357
      %v406 = vpack.c.b16 %v362, %v358
      %v407 = vpack.c.b16 %v367, %v363
      %v408 = vpack.c.b16 %v368, %v364
      %v409 = vpack.c.b16 %v369, %v365
      %v410 = vpack.c.b16 %v370, %v366
      %v411 = vpack.c.b16 %v375, %v371
      %v412 = vpack.c.b16 %v376, %v372
      %v413 = vpack.c.b16 %v377, %v373
      %v414 = vpack.c.b16 %v378, %v374
      %v415 = vpack.c.b16 %v383, %v379
      %v416 = vpack.c.b16 %v384, %v380
      %v417 = vpack.c.b16 %v385, %v381
      %v418 = vpack.c.b16 %v386, %v382
      %v515 = vunpack.c.l.b16 %v223
      %v516 = vunpack.c.l.b16 %v224
      %v517 = vunpack.c.l.b16 %v225
      %v518 = vunpack.c.l.b16 %v226
      %v519 = vunpack.c.l.b16 %v227
      %v520 = vunpack.c.l.b16 %v228
      %v521 = vunpack.c.l.b16 %v229
      %v522 = vunpack.c.l.b16 %v230
      %v523 = vunpack.c.l.b16 %v231
      %v524 = vunpack.c.l.b16 %v232
      %v525 = vunpack.c.l.b16 %v233
      %v526 = vunpack.c.l.b16 %v234
      %v527 = vunpack.c.l.b16 %v235
      %v528 = vunpack.c.l.b16 %v236
      %v529 = vunpack.c.l.b16 %v237
      %v530 = vunpack.c.l.b16 %v238
      %v531 = vunpack.c.l.b16 %v239
      %v532 = vunpack.c.l.b16 %v240
      %v533 = vunpack.c.l.b16 %v241
      %v534 = vunpack.c.l.b16 %v242
      %v535 = vunpack.c.l.b16 %v243
      %v536 = vunpack.c.l.b16 %v244
      %v537 = vunpack.c.l.b16 %v245
      %v538 = vunpack.c.l.b16 %v246
      %v539 = vunpack.c.l.b16 %v247
      %v540 = vunpack.c.l.b16 %v248
      %v541 = vunpack.c.l.b16 %v249
      %v542 = vunpack.c.l.b16 %v250
      %v543 = vunpack.c.l.b16 %v251
      %v544 = vunpack.c.l.b16 %v252
      %v545 = vunpack.c.l.b16 %v253
      %v546 = vunpack.c.l.b16 %v254
      %v547 = vunpack.c.l.b16 %v255
      %v548 = vunpack.c.l.b16 %v256
      %v549 = vunpack.c.l.b16 %v257
      %v550 = vunpack.c.l.b16 %v258
      %v551 = vunpack.c.l.b16 %v259
      %v552 = vunpack.c.l.b16 %v260
      %v553 = vunpack.c.l.b16 %v261
      %v554 = vunpack.c.l.b16 %v262
      %v555 = vunpack.c.l.b16 %v263
      %v556 = vunpack.c.l.b16 %v264
      %v557 = vunpack.c.l.b16 %v265
      %v558 = vunpack.c.l.b16 %v266
      %v559 = vunpack.c.l.b16 %v267
      %v560 = vunpack.c.l.b16 %v268
      %v561 = vunpack.c.l.b16 %v269
      %v562 = vunpack.c.l.b16 %v270
      %v563 = vunpack.c.l.b16 %v271
      %v564 = vunpack.c.l.b16 %v272
      %v565 = vunpack.c.l.b16 %v273
      %v566 = vunpack.c.l.b16 %v274
      %v567 = vunpack.c.l.b16 %v275
      %v568 = vunpack.c.l.b16 %v276
      %v569 = vunpack.c.l.b16 %v277
      %v570 = vunpack.c.l.b16 %v278
      %v571 = vunpack.c.l.b16 %v279
      %v572 = vunpack.c.l.b16 %v280
      %v573 = vunpack.c.l.b16 %v281
      %v574 = vunpack.c.l.b16 %v282
      %v575 = vunpack.c.l.b16 %v283
      %v576 = vunpack.c.l.b16 %v284
      %v577 = vunpack.c.l.b16 %v285
      %v578 = vunpack.c.l.b16 %v286
      %v579 = vpack.c.b16 %v516, %v515
      %v580 = vpack.c.b16 %v518, %v517
      %v581 = vpack.c.b16 %v520, %v519
      %v582 = vpack.c.b16 %v522, %v521
      %v583 = vpack.c.b16 %v524, %v523
      %v584 = vpack.c.b16 %v526, %v525
      %v585 = vpack.c.b16 %v528, %v527
      %v586 = vpack.c.b16 %v530, %v529
      %v587 = vpack.c.b16 %v532, %v531
      %v588 = vpack.c.b16 %v534, %v533
      %v589 = vpack.c.b16 %v536, %v535
      %v590 = vpack.c.b16 %v538, %v537
      %v591 = vpack.c.b16 %v540, %v539
      %v592 = vpack.c.b16 %v542, %v541
      %v593 = vpack.c.b16 %v544, %v543
      %v594 = vpack.c.b16 %v546, %v545
      %v595 = vpack.c.b16 %v548, %v547
      %v596 = vpack.c.b16 %v550, %v549
      %v597 = vpack.c.b16 %v552, %v551
      %v598 = vpack.c.b16 %v554, %v553
      %v599 = vpack.c.b16 %v556, %v555
      %v600 = vpack.c.b16 %v558, %v557
      %v601 = vpack.c.b16 %v560, %v559
      %v602 = vpack.c.b16 %v562, %v561
      %v603 = vpack.c.b16 %v564, %v563
      %v604 = vpack.c.b16 %v566, %v565
      %v605 = vpack.c.b16 %v568, %v567
      %v606 = vpack.c.b16 %v570, %v569
      %v607 = vpack.c.b16 %v572, %v571
      %v608 = vpack.c.b16 %v574, %v573
      %v609 = vpack.c.b16 %v576, %v575
      %v610 = vpack.c.b16 %v578, %v577
      %643 = vmatpush.bf16.msra.mxu0 %v586
      %644 = vmatpush.bf16.msra.mxu0 %v585
      %645 = vmatpush.bf16.msra.mxu0 %v584
      %646 = vmatpush.bf16.msra.mxu0 %v583
      %647 = vmatpush.bf16.msra.mxu0 %v582
      %648 = vmatpush.bf16.msra.mxu0 %v581
      %649 = vmatpush.bf16.msra.mxu0 %v580
      %650 = vmatpush.bf16.msra.mxu0 %v579
      %651 = vmatmul.bf16.gmra.mxu0 %v387
      %v652 = vpop.f32.mrf.mxu0
      %v653 = vadd.f32 %v289, %v652
      %v654 = vpop.f32.mrf.mxu0
      %v655 = vadd.f32 %v289, %v654
      %656 = vmatmul.bf16.gmra.mxu0 %v391
      %v657 = vpop.f32.mrf.mxu0
      %v658 = vadd.f32 %v289, %v657
      %v659 = vpop.f32.mrf.mxu0
      %v660 = vadd.f32 %v289, %v659
      %661 = vmatmul.bf16.gmra.mxu0 %v395
      %v662 = vpop.f32.mrf.mxu0
      %v663 = vadd.f32 %v289, %v662
      %v664 = vpop.f32.mrf.mxu0
      %v665 = vadd.f32 %v289, %v664
      %666 = vmatmul.bf16.gmra.mxu0 %v399
      %v667 = vpop.f32.mrf.mxu0
      %v668 = vadd.f32 %v289, %v667
      %v669 = vpop.f32.mrf.mxu0
      %v670 = vadd.f32 %v289, %v669
      %671 = vmatmul.bf16.gmra.mxu0 %v403
      %v672 = vpop.f32.mrf.mxu0
      %v673 = vadd.f32 %v289, %v672
      %v674 = vpop.f32.mrf.mxu0
      %v675 = vadd.f32 %v289, %v674
      %676 = vmatmul.bf16.gmra.mxu0 %v407
      %v677 = vpop.f32.mrf.mxu0
      %v678 = vadd.f32 %v289, %v677
      %v679 = vpop.f32.mrf.mxu0
      %v680 = vadd.f32 %v289, %v679
      %681 = vmatmul.bf16.gmra.mxu0 %v411
      %v682 = vpop.f32.mrf.mxu0
      %v683 = vadd.f32 %v289, %v682
      %v684 = vpop.f32.mrf.mxu0
      %v685 = vadd.f32 %v289, %v684
      %686 = vmatmul.bf16.gmra.mxu0 %v415
      %v687 = vpop.f32.mrf.mxu0
      %v688 = vadd.f32 %v289, %v687
      %v689 = vpop.f32.mrf.mxu0
      %v690 = vadd.f32 %v289, %v689
      %691 = vdwg.mxu0
      %692 = vmatpush.bf16.msra.mxu0 %v594
      %693 = vmatpush.bf16.msra.mxu0 %v593
      %694 = vmatpush.bf16.msra.mxu0 %v592
      %695 = vmatpush.bf16.msra.mxu0 %v591
      %696 = vmatpush.bf16.msra.mxu0 %v590
      %697 = vmatpush.bf16.msra.mxu0 %v589
      %698 = vmatpush.bf16.msra.mxu0 %v588
      %699 = vmatpush.bf16.msra.mxu0 %v587
      %700 = vmatmul.bf16.gmra.mxu0 %v388
      %v701 = vpop.f32.mrf.mxu0
      %v702 = vadd.f32 %v653, %v701
      %v703 = vpop.f32.mrf.mxu0
      %v704 = vadd.f32 %v655, %v703
      %705 = vmatmul.bf16.gmra.mxu0 %v392
      %v706 = vpop.f32.mrf.mxu0
      %v707 = vadd.f32 %v658, %v706
      %v708 = vpop.f32.mrf.mxu0
      %v709 = vadd.f32 %v660, %v708
      %710 = vmatmul.bf16.gmra.mxu0 %v396
      %v711 = vpop.f32.mrf.mxu0
      %v712 = vadd.f32 %v663, %v711
      %v713 = vpop.f32.mrf.mxu0
      %v714 = vadd.f32 %v665, %v713
      %715 = vmatmul.bf16.gmra.mxu0 %v400
      %v716 = vpop.f32.mrf.mxu0
      %v717 = vadd.f32 %v668, %v716
      %v718 = vpop.f32.mrf.mxu0
      %v719 = vadd.f32 %v670, %v718
      %720 = vmatmul.bf16.gmra.mxu0 %v404
      %v721 = vpop.f32.mrf.mxu0
      %v722 = vadd.f32 %v673, %v721
      %v723 = vpop.f32.mrf.mxu0
      %v724 = vadd.f32 %v675, %v723
      %725 = vmatmul.bf16.gmra.mxu0 %v408
      %v726 = vpop.f32.mrf.mxu0
      %v727 = vadd.f32 %v678, %v726
      %v728 = vpop.f32.mrf.mxu0
      %v729 = vadd.f32 %v680, %v728
      %730 = vmatmul.bf16.gmra.mxu0 %v412
      %v731 = vpop.f32.mrf.mxu0
      %v732 = vadd.f32 %v683, %v731
      %v733 = vpop.f32.mrf.mxu0
      %v734 = vadd.f32 %v685, %v733
      %735 = vmatmul.bf16.gmra.mxu0 %v416
      %v736 = vpop.f32.mrf.mxu0
      %v737 = vadd.f32 %v688, %v736
      %v738 = vpop.f32.mrf.mxu0
      %v739 = vadd.f32 %v690, %v738
      %740 = vdwg.mxu0
      %741 = vmatpush.bf16.msra.mxu0 %v602
      %742 = vmatpush.bf16.msra.mxu0 %v601
      %743 = vmatpush.bf16.msra.mxu0 %v600
      %744 = vmatpush.bf16.msra.mxu0 %v599
      %745 = vmatpush.bf16.msra.mxu0 %v598
      %746 = vmatpush.bf16.msra.mxu0 %v597
      %747 = vmatpush.bf16.msra.mxu0 %v596
      %748 = vmatpush.bf16.msra.mxu0 %v595
      %749 = vmatmul.bf16.gmra.mxu0 %v389
      %v750 = vpop.f32.mrf.mxu0
      %v751 = vadd.f32 %v702, %v750
      %v752 = vpop.f32.mrf.mxu0
      %v753 = vadd.f32 %v704, %v752
      %754 = vmatmul.bf16.gmra.mxu0 %v393
      %v755 = vpop.f32.mrf.mxu0
      %v756 = vadd.f32 %v707, %v755
      %v757 = vpop.f32.mrf.mxu0
      %v758 = vadd.f32 %v709, %v757
      %759 = vmatmul.bf16.gmra.mxu0 %v397
      %v760 = vpop.f32.mrf.mxu0
      %v761 = vadd.f32 %v712, %v760
      %v762 = vpop.f32.mrf.mxu0
      %v763 = vadd.f32 %v714, %v762
      %764 = vmatmul.bf16.gmra.mxu0 %v401
      %v765 = vpop.f32.mrf.mxu0
      %v766 = vadd.f32 %v717, %v765
      %v767 = vpop.f32.mrf.mxu0
      %v768 = vadd.f32 %v719, %v767
      %769 = vmatmul.bf16.gmra.mxu0 %v405
      %v770 = vpop.f32.mrf.mxu0
      %v771 = vadd.f32 %v722, %v770
      %v772 = vpop.f32.mrf.mxu0
      %v773 = vadd.f32 %v724, %v772
      %774 = vmatmul.bf16.gmra.mxu0 %v409
      %v775 = vpop.f32.mrf.mxu0
      %v776 = vadd.f32 %v727, %v775
      %v777 = vpop.f32.mrf.mxu0
      %v778 = vadd.f32 %v729, %v777
      %779 = vmatmul.bf16.gmra.mxu0 %v413
      %v780 = vpop.f32.mrf.mxu0
      %v781 = vadd.f32 %v732, %v780
      %v782 = vpop.f32.mrf.mxu0
      %v783 = vadd.f32 %v734, %v782
      %784 = vmatmul.bf16.gmra.mxu0 %v417
      %v785 = vpop.f32.mrf.mxu0
      %v786 = vadd.f32 %v737, %v785
      %v787 = vpop.f32.mrf.mxu0
      %v788 = vadd.f32 %v739, %v787
      %789 = vdwg.mxu0
      %790 = vmatpush.bf16.msra.mxu0 %v610
      %791 = vmatpush.bf16.msra.mxu0 %v609
      %792 = vmatpush.bf16.msra.mxu0 %v608
      %793 = vmatpush.bf16.msra.mxu0 %v607
      %794 = vmatpush.bf16.msra.mxu0 %v606
      %795 = vmatpush.bf16.msra.mxu0 %v605
      %796 = vmatpush.bf16.msra.mxu0 %v604
      %797 = vmatpush.bf16.msra.mxu0 %v603
      %798 = vmatmul.bf16.gmra.mxu0 %v390
      %v799 = vpop.f32.mrf.mxu0
      %v800 = vadd.f32 %v751, %v799
      %v801 = vpop.f32.mrf.mxu0
      %v802 = vadd.f32 %v753, %v801
      %803 = vmatmul.bf16.gmra.mxu0 %v394
      %v804 = vpop.f32.mrf.mxu0
      %v805 = vadd.f32 %v756, %v804
      %v806 = vpop.f32.mrf.mxu0
      %v807 = vadd.f32 %v758, %v806
      %808 = vmatmul.bf16.gmra.mxu0 %v398
      %v809 = vpop.f32.mrf.mxu0
      %v810 = vadd.f32 %v761, %v809
      %v811 = vpop.f32.mrf.mxu0
      %v812 = vadd.f32 %v763, %v811
      %813 = vmatmul.bf16.gmra.mxu0 %v402
      %v814 = vpop.f32.mrf.mxu0
      %v815 = vadd.f32 %v766, %v814
      %v816 = vpop.f32.mrf.mxu0
      %v817 = vadd.f32 %v768, %v816
      %818 = vmatmul.bf16.gmra.mxu0 %v406
      %v819 = vpop.f32.mrf.mxu0
      %v820 = vadd.f32 %v771, %v819
      %v821 = vpop.f32.mrf.mxu0
      %v822 = vadd.f32 %v773, %v821
      %823 = vmatmul.bf16.gmra.mxu0 %v410
      %v824 = vpop.f32.mrf.mxu0
      %v825 = vadd.f32 %v776, %v824
      %v826 = vpop.f32.mrf.mxu0
      %v827 = vadd.f32 %v778, %v826
      %828 = vmatmul.bf16.gmra.mxu0 %v414
      %v829 = vpop.f32.mrf.mxu0
      %v830 = vadd.f32 %v781, %v829
      %v831 = vpop.f32.mrf.mxu0
      %v832 = vadd.f32 %v783, %v831
      %833 = vmatmul.bf16.gmra.mxu0 %v418
      %v834 = vpop.f32.mrf.mxu0
      %v835 = vadd.f32 %v786, %v834
      %v836 = vpop.f32.mrf.mxu0
      %v837 = vadd.f32 %v788, %v836
      %838 = vdwg.mxu0
      %v839 = vmax.f32 %v800, 0.0
      %v840 = vmax.f32 %v802, 0.0
      %v841 = vmax.f32 %v805, 0.0
      %v842 = vmax.f32 %v807, 0.0
      %v843 = vmax.f32 %v810, 0.0
      %v844 = vmax.f32 %v812, 0.0
      %v845 = vmax.f32 %v815, 0.0
      %v846 = vmax.f32 %v817, 0.0
      %v847 = vmax.f32 %v820, 0.0
      %v848 = vmax.f32 %v822, 0.0
      %v849 = vmax.f32 %v825, 0.0
      %v850 = vmax.f32 %v827, 0.0
      %v851 = vmax.f32 %v830, 0.0
      %v852 = vmax.f32 %v832, 0.0
      %v853 = vmax.f32 %v835, 0.0
      %v854 = vmax.f32 %v837, 0.0
      %855 = vst [vmem:[%s190] sm:$0xff] %v839
      %856 = vst [vmem:[%s190 + $0x8] sm:$0xff] %v840
      %857 = vst [vmem:[%s190 + $0x10] sm:$0xff] %v841
      %858 = vst [vmem:[%s190 + $0x18] sm:$0xff] %v842
      %859 = vst [vmem:[%s190 + $0x20] sm:$0xff] %v843
      %860 = vst [vmem:[%s190 + $0x28] sm:$0xff] %v844
      %861 = vst [vmem:[%s190 + $0x30] sm:$0xff] %v845
      %862 = vst [vmem:[%s190 + $0x38] sm:$0xff] %v846
      %863 = vst [vmem:[%s190 + $0x40] sm:$0xff] %v847
      %864 = vst [vmem:[%s190 + $0x48] sm:$0xff] %v848
      %865 = vst [vmem:[%s190 + $0x50] sm:$0xff] %v849
      %866 = vst [vmem:[%s190 + $0x58] sm:$0xff] %v850
      %867 = vst [vmem:[%s190 + $0x60] sm:$0xff] %v851
      %868 = vst [vmem:[%s190 + $0x68] sm:$0xff] %v852
      %869 = vst [vmem:[%s190 + $0x70] sm:$0xff] %v853
      %870 = vst [vmem:[%s190 + $0x78] sm:$0xff] %v854
      %p871 = scmp.lt.s32.totalorder %s14, 3
      %s872 = scalar_select %p871, %s14, 3
      %s873 = smul.addr %s872, 16
      %s874 = smul.addr %s873, 8
      %s875 = scalar_lea.vmem %s3, %s874
      // Predicated region
      $region33: #{decoder_forward.8} parent=31 // pred_check
        %p876 = pneg %p105
      $region34: #{decoder_forward.8} parent=31 // pred_check_branch
        %878 = sbr.rel (%p876) target = $region36
      $region35: #{decoder_forward.8} parent=31 // pred_region
        _
      $region36: #{decoder_forward.8} parent=31 // pred_fallthru
        _
    $region32: #{decoder_forward.8} parent=5 // pred_fallthru
      _
    %p879 = scmp.le.s32.totalorder 2, %s9
    // Predicated region
    $region37: #{decoder_forward.8} parent=5 // pred_check
      %p880 = pneg %p879
    $region38: #{decoder_forward.8} parent=5 // pred_check_branch
      %882 = sbr.rel (%p880) target = $region40
    $region39: #{decoder_forward.8} parent=5 // pred_region
      %s883 = ssub.s32 %s9, 2
      // Predicated region
      $region41: #{decoder_forward.8} parent=39 // pred_check
        %p884 = pneg %p111
      $region42: #{decoder_forward.8} parent=39 // pred_check_branch
        %886 = sbr.rel (%p884) target = $region44
      $region43: #{decoder_forward.8} parent=39 // pred_region
        %p887 = scmp.lt.s32.totalorder %s15, 3
        %s888 = scalar_select %p887, %s15, 3
        %s889 = smul.addr %s888, 16
        %s890 = smul.addr %s889, 8
        %s891 = scalar_lea.vmem %s3, %s890
      $region44: #{decoder_forward.8} parent=39 // pred_fallthru
        _
    $region40: #{decoder_forward.8} parent=5 // pred_fallthru
      _
  $region6: #{decoder_forward.8} parent=0 // loop_footer
    %s13 = sadd.s32 1, %s9
  $region7: #{decoder_forward.8} parent=0 // loop_footer_branch
    %8 = sbr.rel target = $region3
  $region8: #{decoder_forward.8} parent=0 // loop_exit
    _

// kernel: decoder_forward.9
$region0: #{decoder_forward.9}
  #allocation0 [shape = 'u32[]', space=smem, size = 0x4, offset = 0x4, fixed_abs, tag = 'smem constant byte address 0x4 - core index']
  #allocation1 [shape = 'u32[72,128]{1,0:T(1,128)}', space=vmem, size = 0x9000, scoped, tag = 'internal scratch']
  %s0 = inlined_call_operand.vmem [shape: bf16[4,512,256], index: 0, kind: input, shape index: {}]
  %s1 = inlined_call_operand.vmem [shape: bf16[4,256,128], index: 1, kind: input, shape index: {}]
  %s2 = inlined_call_operand.vmem [shape: f32[1,128], index: 2, kind: input, shape index: {}]
  %s3 = inlined_call_operand.vmem [shape: f32[4,512,128], index: 3, kind: output, shape index: {}]
  %s4 = sld [smem:[#allocation0]]
  $region45: #{decoder_forward.9} parent=0
    _
  %s6 = ssub.s32 1, %s4
  %s7 = scalar_select 0, %s6, %s4
  loop: start=0, step=1, limit=6
  $region2: #{decoder_forward.9} parent=0 // loop_pre_header
    _
  $region3: #{decoder_forward.9} parent=0 // loop_header
    %s9 = sphi 0, %s13
    %p10 = scmp.ge.s32.totalorder %s9, 6
    %s19 = sphi 0, %s21
    %s22 = sphi 0, %s19
    %s23 = sphi 0, %s22
    %s39 = sphi 0, %s23
    %s45 = sphi 0, %s47
    %s48 = sphi 0, %s45
    %s49 = sphi 0, %s48
    %s65 = sphi 0, %s49
    %s69 = sphi 0, %s69
    %s71 = sphi 0, %s69
    %s72 = sphi 0, %s71
    %s86 = sphi 0, %s72
    %s92 = sphi 0, %s94
    %s95 = sphi 0, %s92
    %s96 = sphi 0, %s95
    %s112 = sphi 0, %s96
  $region4: #{decoder_forward.9} parent=0 // loop_header_branch
    %12 = sbr.rel (%p10) target = $region8
  $region5: #{decoder_forward.9} parent=0 // loop_body
    %s14 = ssub.s32 %s9, 1
    %s15 = ssub.s32 %s9, 2
    %s16 = sadd.s32 %s9, 1
    %s17 = ssub.s32 %s9, %s16
    %p18 = scmp.eq.s32.totalorder %s17, 0
    %s20 = sadd.s32 %s19, 1
    %s21 = scalar_select %p18, %s19, %s20
    %p24 = pneg %p18
    %p25 = scmp.eq.s32.totalorder %s9, 3
    %p26 = por %p24, %p25
    %p27 = scmp.ne.s32.totalorder %s19, %s22
    %p28 = scmp.eq.s32.totalorder %s9, 0
    %p29 = por %p27, %p28
    %p30 = scmp.ne.s32.totalorder %s19, %s22
    %p31 = scmp.eq.s32.totalorder %s14, 3
    %p32 = por %p30, %p31
    %p33 = scmp.ne.s32.totalorder %s22, %s23
    %p34 = scmp.eq.s32.totalorder %s14, 0
    %p35 = por %p33, %p34
    %p36 = scmp.ne.s32.totalorder %s22, %s23
    %p37 = scmp.eq.s32.totalorder %s15, 3
    %p38 = por %p36, %p37
    %p40 = scmp.ne.s32.totalorder %s23, %s39
    %p41 = scmp.eq.s32.totalorder %s15, 0
    %p42 = por %p40, %p41
    %s43 = ssub.s32 %s9, %s16
    %p44 = scmp.eq.s32.totalorder %s43, 0
    %s46 = sadd.s32 %s45, 1
    %s47 = scalar_select %p44, %s45, %s46
    %p50 = pneg %p44
    %p51 = scmp.eq.s32.totalorder %s9, 3
    %p52 = por %p50, %p51
    %p53 = scmp.ne.s32.totalorder %s45, %s48
    %p54 = scmp.eq.s32.totalorder %s9, 0
    %p55 = por %p53, %p54
    %p56 = scmp.ne.s32.totalorder %s45, %s48
    %p57 = scmp.eq.s32.totalorder %s14, 3
    %p58 = por %p56, %p57
    %p59 = scmp.ne.s32.totalorder %s48, %s49
    %p60 = scmp.eq.s32.totalorder %s14, 0
    %p61 = por %p59, %p60
    %p62 = scmp.ne.s32.totalorder %s48, %s49
    %p63 = scmp.eq.s32.totalorder %s15, 3
    %p64 = por %p62, %p63
    %p66 = scmp.ne.s32.totalorder %s49, %s65
    %p67 = scmp.eq.s32.totalorder %s15, 0
    %p68 = por %p66, %p67
    %s70 = sadd.s32 %s69, 1
    %p73 = scmp.eq.s32.totalorder %s9, 3
    %p74 = scmp.ne.s32.totalorder %s69, %s71
    %p75 = scmp.eq.s32.totalorder %s9, 0
    %p76 = por %p74, %p75
    %p77 = scmp.ne.s32.totalorder %s69, %s71
    %p78 = scmp.eq.s32.totalorder %s14, 3
    %p79 = por %p77, %p78
    %p80 = scmp.ne.s32.totalorder %s71, %s72
    %p81 = scmp.eq.s32.totalorder %s14, 0
    %p82 = por %p80, %p81
    %p83 = scmp.ne.s32.totalorder %s71, %s72
    %p84 = scmp.eq.s32.totalorder %s15, 3
    %p85 = por %p83, %p84
    %p87 = scmp.ne.s32.totalorder %s72, %s86
    %p88 = scmp.eq.s32.totalorder %s15, 0
    %p89 = por %p87, %p88
    %s90 = ssub.s32 %s9, %s16
    %p91 = scmp.eq.s32.totalorder %s90, 0
    %s93 = sadd.s32 %s92, 1
    %s94 = scalar_select %p91, %s92, %s93
    %p97 = pneg %p91
    %p98 = scmp.eq.s32.totalorder %s9, 3
    %p99 = por %p97, %p98
    %p100 = scmp.ne.s32.totalorder %s92, %s95
    %p101 = scmp.eq.s32.totalorder %s9, 0
    %p102 = por %p100, %p101
    %p103 = scmp.ne.s32.totalorder %s92, %s95
    %p104 = scmp.eq.s32.totalorder %s14, 3
    %p105 = por %p103, %p104
    %p106 = scmp.ne.s32.totalorder %s95, %s96
    %p107 = scmp.eq.s32.totalorder %s14, 0
    %p108 = por %p106, %p107
    %p109 = scmp.ne.s32.totalorder %s95, %s96
    %p110 = scmp.eq.s32.totalorder %s15, 3
    %p111 = por %p109, %p110
    %p113 = scmp.ne.s32.totalorder %s96, %s112
    %p114 = scmp.eq.s32.totalorder %s15, 0
    %p115 = por %p113, %p114
    %p116 = scmp.le.s32.totalorder 1, %s9
    %p117 = scmp.lt.s32.totalorder %s9, 5
    %p118 = pnand %p116, %p117
    %p119 = pneg %p118
    // Predicated region
    $region9: #{decoder_forward.9} parent=5 // pred_check
      _
    $region10: #{decoder_forward.9} parent=5 // pred_check_branch
      %121 = sbr.rel (%p118) target = $region12
    $region11: #{decoder_forward.9} parent=5 // pred_region
      %s122 = ssub.s32 %s9, 1
      // Predicated region
      $region13: #{decoder_forward.9} parent=11 // pred_check
        %p123 = pneg %p82
      $region14: #{decoder_forward.9} parent=11 // pred_check_branch
        %125 = sbr.rel (%p123) target = $region16
      $region15: #{decoder_forward.9} parent=11 // pred_region
        _
      $region16: #{decoder_forward.9} parent=11 // pred_fallthru
        _
    $region12: #{decoder_forward.9} parent=5 // pred_fallthru
      _
    %p126 = scmp.lt.s32.totalorder %s9, 4
    // Predicated region
    $region17: #{decoder_forward.9} parent=5 // pred_check
      %p127 = pneg %p126
    $region18: #{decoder_forward.9} parent=5 // pred_check_branch
      %129 = sbr.rel (%p127) target = $region20
    $region19: #{decoder_forward.9} parent=5 // pred_region
      // Predicated region
      $region21: #{decoder_forward.9} parent=19 // pred_check
        %p130 = pneg %p29
      $region22: #{decoder_forward.9} parent=19 // pred_check_branch
        %132 = sbr.rel (%p130) target = $region24
      $region23: #{decoder_forward.9} parent=19 // pred_region
        %p133 = scmp.lt.s32.totalorder %s9, 3
        %s134 = scalar_select %p133, %s9, 3
        %s135 = smul.addr %s134, 128
        %s136 = smul.addr %s135, 4
        %s137 = scalar_lea.vmem %s0, %s136
      $region24: #{decoder_forward.9} parent=19 // pred_fallthru
        _
      // Predicated region
      $region25: #{decoder_forward.9} parent=19 // pred_check
        %p138 = pneg %p55
      $region26: #{decoder_forward.9} parent=19 // pred_check_branch
        %140 = sbr.rel (%p138) target = $region28
      $region27: #{decoder_forward.9} parent=19 // pred_region
        %p141 = scmp.lt.s32.totalorder %s9, 3
        %s142 = scalar_select %p141, %s9, 3
        %s143 = smul.addr %s142, 32
        %s144 = smul.addr %s143, 4
        %s145 = scalar_lea.vmem %s1, %s144
      $region28: #{decoder_forward.9} parent=19 // pred_fallthru
        _
    $region20: #{decoder_forward.9} parent=5 // pred_fallthru
      _
    %p146 = scmp.le.s32.totalorder 1, %s9
    %p147 = scmp.lt.s32.totalorder %s9, 5
    %p148 = pnand %p146, %p147
    %p149 = pneg %p148
    // Predicated region
    $region29: #{decoder_forward.9} parent=5 // pred_check
      _
    $region30: #{decoder_forward.9} parent=5 // pred_check_branch
      %151 = sbr.rel (%p148) target = $region32
    $region31: #{decoder_forward.9} parent=5 // pred_region
      %s152 = ssub.s32 %s9, 1
      %p153 = scmp.lt.s32.totalorder %s14, 3
      %s154 = scalar_select %p153, %s14, 3
      %s155 = smul.addr %s154, 128
      %s156 = smul.addr %s155, 4
      %s157 = scalar_lea.vmem %s0, %s156
      %p158 = pneg %p35
      %p159 = pneg %p32
      %p160 = scmp.lt.s32.totalorder %s14, 3
      %s161 = scalar_select %p160, %s14, 3
      %s162 = smul.addr %s161, 32
      %s163 = smul.addr %s162, 4
      %s164 = scalar_lea.vmem %s1, %s163
      %p165 = pneg %p61
      %p166 = pneg %p58
      %p167 = pneg %p82
      %p168 = pneg %p79
      %p169 = pneg %p108
      %p170 = pneg %p105
      %p171 = scmp.lt.s32.totalorder %s14, 3
      %s172 = scalar_select %p171, %s14, 3
      %s173 = smul.addr %s172, 64
      %s174 = smul.addr %s173, 8
      %s175 = scalar_lea.vmem %s3, %s174
      %p176 = scmp.lt.s32.totalorder %s14, 3
      %s177 = scalar_select %p176, %s14, 3
      %s178 = smul.addr %s177, 128
      %s179 = smul.addr %s178, 4
      %s180 = scalar_lea.vmem %s0, %s179
      %p181 = scmp.lt.s32.totalorder %s14, 3
      %s182 = scalar_select %p181, %s14, 3
      %s183 = smul.addr %s182, 32
      %s184 = smul.addr %s183, 4
      %s185 = scalar_lea.vmem %s1, %s184
      %p186 = scmp.lt.s32.totalorder %s14, 3
      %s187 = scalar_select %p186, %s14, 3
      %s188 = smul.addr %s187, 64
      %s189 = smul.addr %s188, 8
      %s190 = scalar_lea.vmem %s3, %s189
      %v191 = vld [vmem:[%s180] sm:$0xff]
      %v192 = vld [vmem:[%s180 + $0x8] sm:$0xff]
      %v193 = vld [vmem:[%s180 + $0x10] sm:$0xff]
      %v194 = vld [vmem:[%s180 + $0x18] sm:$0xff]
      %v195 = vld [vmem:[%s180 + $0x20] sm:$0xff]
      %v196 = vld [vmem:[%s180 + $0x28] sm:$0xff]
      %v197 = vld [vmem:[%s180 + $0x30] sm:$0xff]
      %v198 = vld [vmem:[%s180 + $0x38] sm:$0xff]
      %v199 = vld [vmem:[%s180 + $0x40] sm:$0xff]
      %v200 = vld [vmem:[%s180 + $0x48] sm:$0xff]
      %v201 = vld [vmem:[%s180 + $0x50] sm:$0xff]
      %v202 = vld [vmem:[%s180 + $0x58] sm:$0xff]
      %v203 = vld [vmem:[%s180 + $0x60] sm:$0xff]
      %v204 = vld [vmem:[%s180 + $0x68] sm:$0xff]
      %v205 = vld [vmem:[%s180 + $0x70] sm:$0xff]
      %v206 = vld [vmem:[%s180 + $0x78] sm:$0xff]
      %v207 = vld [vmem:[%s180 + $0x80] sm:$0xff]
      %v208 = vld [vmem:[%s180 + $0x88] sm:$0xff]
      %v209 = vld [vmem:[%s180 + $0x90] sm:$0xff]
      %v210 = vld [vmem:[%s180 + $0x98] sm:$0xff]
      %v211 = vld [vmem:[%s180 + $0xa0] sm:$0xff]
      %v212 = vld [vmem:[%s180 + $0xa8] sm:$0xff]
      %v213 = vld [vmem:[%s180 + $0xb0] sm:$0xff]
      %v214 = vld [vmem:[%s180 + $0xb8] sm:$0xff]
      %v215 = vld [vmem:[%s180 + $0xc0] sm:$0xff]
      %v216 = vld [vmem:[%s180 + $0xc8] sm:$0xff]
      %v217 = vld [vmem:[%s180 + $0xd0] sm:$0xff]
      %v218 = vld [vmem:[%s180 + $0xd8] sm:$0xff]
      %v219 = vld [vmem:[%s180 + $0xe0] sm:$0xff]
      %v220 = vld [vmem:[%s180 + $0xe8] sm:$0xff]
      %v221 = vld [vmem:[%s180 + $0xf0] sm:$0xff]
      %v222 = vld [vmem:[%s180 + $0xf8] sm:$0xff]
      %v223 = vld [vmem:[%s180 + $0x100] sm:$0xff]
      %v224 = vld [vmem:[%s180 + $0x108] sm:$0xff]
      %v225 = vld [vmem:[%s180 + $0x110] sm:$0xff]
      %v226 = vld [vmem:[%s180 + $0x118] sm:$0xff]
      %v227 = vld [vmem:[%s180 + $0x120] sm:$0xff]
      %v228 = vld [vmem:[%s180 + $0x128] sm:$0xff]
      %v229 = vld [vmem:[%s180 + $0x130] sm:$0xff]
      %v230 = vld [vmem:[%s180 + $0x138] sm:$0xff]
      %v231 = vld [vmem:[%s180 + $0x140] sm:$0xff]
      %v232 = vld [vmem:[%s180 + $0x148] sm:$0xff]
      %v233 = vld [vmem:[%s180 + $0x150] sm:$0xff]
      %v234 = vld [vmem:[%s180 + $0x158] sm:$0xff]
      %v235 = vld [vmem:[%s180 + $0x160] sm:$0xff]
      %v236 = vld [vmem:[%s180 + $0x168] sm:$0xff]
      %v237 = vld [vmem:[%s180 + $0x170] sm:$0xff]
      %v238 = vld [vmem:[%s180 + $0x178] sm:$0xff]
      %v239 = vld [vmem:[%s180 + $0x180] sm:$0xff]
      %v240 = vld [vmem:[%s180 + $0x188] sm:$0xff]
      %v241 = vld [vmem:[%s180 + $0x190] sm:$0xff]
      %v242 = vld [vmem:[%s180 + $0x198] sm:$0xff]
      %v243 = vld [vmem:[%s180 + $0x1a0] sm:$0xff]
      %v244 = vld [vmem:[%s180 + $0x1a8] sm:$0xff]
      %v245 = vld [vmem:[%s180 + $0x1b0] sm:$0xff]
      %v246 = vld [vmem:[%s180 + $0x1b8] sm:$0xff]
      %v247 = vld [vmem:[%s180 + $0x1c0] sm:$0xff]
      %v248 = vld [vmem:[%s180 + $0x1c8] sm:$0xff]
      %v249 = vld [vmem:[%s180 + $0x1d0] sm:$0xff]
      %v250 = vld [vmem:[%s180 + $0x1d8] sm:$0xff]
      %v251 = vld [vmem:[%s180 + $0x1e0] sm:$0xff]
      %v252 = vld [vmem:[%s180 + $0x1e8] sm:$0xff]
      %v253 = vld [vmem:[%s180 + $0x1f0] sm:$0xff]
      %v254 = vld [vmem:[%s180 + $0x1f8] sm:$0xff]
      %v255 = vld [vmem:[%s185] sm:$0xf]
      %v256 = vld [vmem:[%s185 + $0x4] sm:$0xf]
      %v257 = vld [vmem:[%s185 + $0x8] sm:$0xf]
      %v258 = vld [vmem:[%s185 + $0xc] sm:$0xf]
      %v259 = vld [vmem:[%s185 + $0x10] sm:$0xf]
      %v260 = vld [vmem:[%s185 + $0x14] sm:$0xf]
      %v261 = vld [vmem:[%s185 + $0x18] sm:$0xf]
      %v262 = vld [vmem:[%s185 + $0x1c] sm:$0xf]
      %v263 = vld [vmem:[%s185 + $0x20] sm:$0xf]
      %v264 = vld [vmem:[%s185 + $0x24] sm:$0xf]
      %v265 = vld [vmem:[%s185 + $0x28] sm:$0xf]
      %v266 = vld [vmem:[%s185 + $0x2c] sm:$0xf]
      %v267 = vld [vmem:[%s185 + $0x30] sm:$0xf]
      %v268 = vld [vmem:[%s185 + $0x34] sm:$0xf]
      %v269 = vld [vmem:[%s185 + $0x38] sm:$0xf]
      %v270 = vld [vmem:[%s185 + $0x3c] sm:$0xf]
      %v271 = vld [vmem:[%s185 + $0x40] sm:$0xf]
      %v272 = vld [vmem:[%s185 + $0x44] sm:$0xf]
      %v273 = vld [vmem:[%s185 + $0x48] sm:$0xf]
      %v274 = vld [vmem:[%s185 + $0x4c] sm:$0xf]
      %v275 = vld [vmem:[%s185 + $0x50] sm:$0xf]
      %v276 = vld [vmem:[%s185 + $0x54] sm:$0xf]
      %v277 = vld [vmem:[%s185 + $0x58] sm:$0xf]
      %v278 = vld [vmem:[%s185 + $0x5c] sm:$0xf]
      %v279 = vld [vmem:[%s185 + $0x60] sm:$0xf]
      %v280 = vld [vmem:[%s185 + $0x64] sm:$0xf]
      %v281 = vld [vmem:[%s185 + $0x68] sm:$0xf]
      %v282 = vld [vmem:[%s185 + $0x6c] sm:$0xf]
      %v283 = vld [vmem:[%s185 + $0x70] sm:$0xf]
      %v284 = vld [vmem:[%s185 + $0x74] sm:$0xf]
      %v285 = vld [vmem:[%s185 + $0x78] sm:$0xf]
      %v286 = vld [vmem:[%s185 + $0x7c] sm:$0xf]
      %v287 = vld [vmem:[%s2] sm:$0x1]
      %v289 = vperm.slane %v287, 0
      %v355 = vunpack.c.l.b16 %v191
      %v356 = vunpack.c.h.b16 %v191
      %v357 = vunpack.c.l.b16 %v192
      %v358 = vunpack.c.h.b16 %v192
      %v359 = vunpack.c.l.b16 %v193
      %v360 = vunpack.c.h.b16 %v193
      %v361 = vunpack.c.l.b16 %v194
      %v362 = vunpack.c.h.b16 %v194
      %v363 = vunpack.c.l.b16 %v195
      %v364 = vunpack.c.h.b16 %v195
      %v365 = vunpack.c.l.b16 %v196
      %v366 = vunpack.c.h.b16 %v196
      %v367 = vunpack.c.l.b16 %v197
      %v368 = vunpack.c.h.b16 %v197
      %v369 = vunpack.c.l.b16 %v198
      %v370 = vunpack.c.h.b16 %v198
      %v371 = vunpack.c.l.b16 %v199
      %v372 = vunpack.c.h.b16 %v199
      %v373 = vunpack.c.l.b16 %v200
      %v374 = vunpack.c.h.b16 %v200
      %v375 = vunpack.c.l.b16 %v201
      %v376 = vunpack.c.h.b16 %v201
      %v377 = vunpack.c.l.b16 %v202
      %v378 = vunpack.c.h.b16 %v202
      %v379 = vunpack.c.l.b16 %v203
      %v380 = vunpack.c.h.b16 %v203
      %v381 = vunpack.c.l.b16 %v204
      %v382 = vunpack.c.h.b16 %v204
      %v383 = vunpack.c.l.b16 %v205
      %v384 = vunpack.c.h.b16 %v205
      %v385 = vunpack.c.l.b16 %v206
      %v386 = vunpack.c.h.b16 %v206
      %v387 = vunpack.c.l.b16 %v207
      %v388 = vunpack.c.h.b16 %v207
      %v389 = vunpack.c.l.b16 %v208
      %v390 = vunpack.c.h.b16 %v208
      %v391 = vunpack.c.l.b16 %v209
      %v392 = vunpack.c.h.b16 %v209
      %v393 = vunpack.c.l.b16 %v210
      %v394 = vunpack.c.h.b16 %v210
      %v395 = vunpack.c.l.b16 %v211
      %v396 = vunpack.c.h.b16 %v211
      %v397 = vunpack.c.l.b16 %v212
      %v398 = vunpack.c.h.b16 %v212
      %v399 = vunpack.c.l.b16 %v213
      %v400 = vunpack.c.h.b16 %v213
      %v401 = vunpack.c.l.b16 %v214
      %v402 = vunpack.c.h.b16 %v214
      %v403 = vunpack.c.l.b16 %v215
      %v404 = vunpack.c.h.b16 %v215
      %v405 = vunpack.c.l.b16 %v216
      %v406 = vunpack.c.h.b16 %v216
      %v407 = vunpack.c.l.b16 %v217
      %v408 = vunpack.c.h.b16 %v217
      %v409 = vunpack.c.l.b16 %v218
      %v410 = vunpack.c.h.b16 %v218
      %v411 = vunpack.c.l.b16 %v219
      %v412 = vunpack.c.h.b16 %v219
      %v413 = vunpack.c.l.b16 %v220
      %v414 = vunpack.c.h.b16 %v220
      %v415 = vunpack.c.l.b16 %v221
      %v416 = vunpack.c.h.b16 %v221
      %v417 = vunpack.c.l.b16 %v222
      %v418 = vunpack.c.h.b16 %v222
      %v419 = vunpack.c.l.b16 %v223
      %v420 = vunpack.c.h.b16 %v223
      %v421 = vunpack.c.l.b16 %v224
      %v422 = vunpack.c.h.b16 %v224
      %v423 = vunpack.c.l.b16 %v225
      %v424 = vunpack.c.h.b16 %v225
      %v425 = vunpack.c.l.b16 %v226
      %v426 = vunpack.c.h.b16 %v226
      %v427 = vunpack.c.l.b16 %v227
      %v428 = vunpack.c.h.b16 %v227
      %v429 = vunpack.c.l.b16 %v228
      %v430 = vunpack.c.h.b16 %v228
      %v431 = vunpack.c.l.b16 %v229
      %v432 = vunpack.c.h.b16 %v229
      %v433 = vunpack.c.l.b16 %v230
      %v434 = vunpack.c.h.b16 %v230
      %v435 = vunpack.c.l.b16 %v231
      %v436 = vunpack.c.h.b16 %v231
      %v437 = vunpack.c.l.b16 %v232
      %v438 = vunpack.c.h.b16 %v232
      %v439 = vunpack.c.l.b16 %v233
      %v440 = vunpack.c.h.b16 %v233
      %v441 = vunpack.c.l.b16 %v234
      %v442 = vunpack.c.h.b16 %v234
      %v443 = vunpack.c.l.b16 %v235
      %v444 = vunpack.c.h.b16 %v235
      %v445 = vunpack.c.l.b16 %v236
      %v446 = vunpack.c.h.b16 %v236
      %v447 = vunpack.c.l.b16 %v237
      %v448 = vunpack.c.h.b16 %v237
      %v449 = vunpack.c.l.b16 %v238
      %v450 = vunpack.c.h.b16 %v238
      %v451 = vunpack.c.l.b16 %v239
      %v452 = vunpack.c.h.b16 %v239
      %v453 = vunpack.c.l.b16 %v240
      %v454 = vunpack.c.h.b16 %v240
      %v455 = vunpack.c.l.b16 %v241
      %v456 = vunpack.c.h.b16 %v241
      %v457 = vunpack.c.l.b16 %v242
      %v458 = vunpack.c.h.b16 %v242
      %v459 = vunpack.c.l.b16 %v243
      %v460 = vunpack.c.h.b16 %v243
      %v461 = vunpack.c.l.b16 %v244
      %v462 = vunpack.c.h.b16 %v244
      %v463 = vunpack.c.l.b16 %v245
      %v464 = vunpack.c.h.b16 %v245
      %v465 = vunpack.c.l.b16 %v246
      %v466 = vunpack.c.h.b16 %v246
      %v467 = vunpack.c.l.b16 %v247
      %v468 = vunpack.c.h.b16 %v247
      %v469 = vunpack.c.l.b16 %v248
      %v470 = vunpack.c.h.b16 %v248
      %v471 = vunpack.c.l.b16 %v249
      %v472 = vunpack.c.h.b16 %v249
      %v473 = vunpack.c.l.b16 %v250
      %v474 = vunpack.c.h.b16 %v250
      %v475 = vunpack.c.l.b16 %v251
      %v476 = vunpack.c.h.b16 %v251
      %v477 = vunpack.c.l.b16 %v252
      %v478 = vunpack.c.h.b16 %v252
      %v479 = vunpack.c.l.b16 %v253
      %v480 = vunpack.c.h.b16 %v253
      %v481 = vunpack.c.l.b16 %v254
      %v482 = vunpack.c.h.b16 %v254
      %v483 = vpack.c.b16 %v357, %v355
      %v484 = vpack.c.b16 %v358, %v356
      %v485 = vpack.c.b16 %v361, %v359
      %v486 = vpack.c.b16 %v362, %v360
      %v487 = vpack.c.b16 %v365, %v363
      %v488 = vpack.c.b16 %v366, %v364
      %v489 = vpack.c.b16 %v369, %v367
      %v490 = vpack.c.b16 %v370, %v368
      %v491 = vpack.c.b16 %v373, %v371
      %v492 = vpack.c.b16 %v374, %v372
      %v493 = vpack.c.b16 %v377, %v375
      %v494 = vpack.c.b16 %v378, %v376
      %v495 = vpack.c.b16 %v381, %v379
      %v496 = vpack.c.b16 %v382, %v380
      %v497 = vpack.c.b16 %v385, %v383
      %v498 = vpack.c.b16 %v386, %v384
      %v499 = vpack.c.b16 %v389, %v387
      %v500 = vpack.c.b16 %v390, %v388
      %v501 = vpack.c.b16 %v393, %v391
      %v502 = vpack.c.b16 %v394, %v392
      %v503 = vpack.c.b16 %v397, %v395
      %v504 = vpack.c.b16 %v398, %v396
      %v505 = vpack.c.b16 %v401, %v399
      %v506 = vpack.c.b16 %v402, %v400
      %v507 = vpack.c.b16 %v405, %v403
      %v508 = vpack.c.b16 %v406, %v404
      %v509 = vpack.c.b16 %v409, %v407
      %v510 = vpack.c.b16 %v410, %v408
      %v511 = vpack.c.b16 %v413, %v411
      %v512 = vpack.c.b16 %v414, %v412
      %v513 = vpack.c.b16 %v417, %v415
      %v514 = vpack.c.b16 %v418, %v416
      %v515 = vpack.c.b16 %v421, %v419
      %v516 = vpack.c.b16 %v422, %v420
      %v517 = vpack.c.b16 %v425, %v423
      %v518 = vpack.c.b16 %v426, %v424
      %v519 = vpack.c.b16 %v429, %v427
      %v520 = vpack.c.b16 %v430, %v428
      %v521 = vpack.c.b16 %v433, %v431
      %v522 = vpack.c.b16 %v434, %v432
      %v523 = vpack.c.b16 %v437, %v435
      %v524 = vpack.c.b16 %v438, %v436
      %v525 = vpack.c.b16 %v441, %v439
      %v526 = vpack.c.b16 %v442, %v440
      %v527 = vpack.c.b16 %v445, %v443
      %v528 = vpack.c.b16 %v446, %v444
      %v529 = vpack.c.b16 %v449, %v447
      %v530 = vpack.c.b16 %v450, %v448
      %v531 = vpack.c.b16 %v453, %v451
      %v532 = vpack.c.b16 %v454, %v452
      %v533 = vpack.c.b16 %v457, %v455
      %v534 = vpack.c.b16 %v458, %v456
      %v535 = vpack.c.b16 %v461, %v459
      %v536 = vpack.c.b16 %v462, %v460
      %v537 = vpack.c.b16 %v465, %v463
      %v538 = vpack.c.b16 %v466, %v464
      %v539 = vpack.c.b16 %v469, %v467
      %v540 = vpack.c.b16 %v470, %v468
      %v541 = vpack.c.b16 %v473, %v471
      %v542 = vpack.c.b16 %v474, %v472
      %v543 = vpack.c.b16 %v477, %v475
      %v544 = vpack.c.b16 %v478, %v476
      %v545 = vpack.c.b16 %v481, %v479
      %v546 = vpack.c.b16 %v482, %v480
      %v643 = vunpack.c.l.b16 %v255
      %v644 = vunpack.c.l.b16 %v256
      %v645 = vunpack.c.l.b16 %v257
      %v646 = vunpack.c.l.b16 %v258
      %v647 = vunpack.c.l.b16 %v259
      %v648 = vunpack.c.l.b16 %v260
      %v649 = vunpack.c.l.b16 %v261
      %v650 = vunpack.c.l.b16 %v262
      %v651 = vunpack.c.l.b16 %v263
      %v652 = vunpack.c.l.b16 %v264
      %v653 = vunpack.c.l.b16 %v265
      %v654 = vunpack.c.l.b16 %v266
      %v655 = vunpack.c.l.b16 %v267
      %v656 = vunpack.c.l.b16 %v268
      %v657 = vunpack.c.l.b16 %v269
      %v658 = vunpack.c.l.b16 %v270
      %v659 = vunpack.c.l.b16 %v271
      %v660 = vunpack.c.l.b16 %v272
      %v661 = vunpack.c.l.b16 %v273
      %v662 = vunpack.c.l.b16 %v274
      %v663 = vunpack.c.l.b16 %v275
      %v664 = vunpack.c.l.b16 %v276
      %v665 = vunpack.c.l.b16 %v277
      %v666 = vunpack.c.l.b16 %v278
      %v667 = vunpack.c.l.b16 %v279
      %v668 = vunpack.c.l.b16 %v280
      %v669 = vunpack.c.l.b16 %v281
      %v670 = vunpack.c.l.b16 %v282
      %v671 = vunpack.c.l.b16 %v283
      %v672 = vunpack.c.l.b16 %v284
      %v673 = vunpack.c.l.b16 %v285
      %v674 = vunpack.c.l.b16 %v286
      %v675 = vpack.c.b16 %v644, %v643
      %v676 = vpack.c.b16 %v646, %v645
      %v677 = vpack.c.b16 %v648, %v647
      %v678 = vpack.c.b16 %v650, %v649
      %v679 = vpack.c.b16 %v652, %v651
      %v680 = vpack.c.b16 %v654, %v653
      %v681 = vpack.c.b16 %v656, %v655
      %v682 = vpack.c.b16 %v658, %v657
      %v683 = vpack.c.b16 %v660, %v659
      %v684 = vpack.c.b16 %v662, %v661
      %v685 = vpack.c.b16 %v664, %v663
      %v686 = vpack.c.b16 %v666, %v665
      %v687 = vpack.c.b16 %v668, %v667
      %v688 = vpack.c.b16 %v670, %v669
      %v689 = vpack.c.b16 %v672, %v671
      %v690 = vpack.c.b16 %v674, %v673
      %707 = vmatpush.bf16.msra.mxu0 %v682
      %708 = vmatpush.bf16.msra.mxu0 %v681
      %709 = vmatpush.bf16.msra.mxu0 %v680
      %710 = vmatpush.bf16.msra.mxu0 %v679
      %711 = vmatpush.bf16.msra.mxu0 %v678
      %712 = vmatpush.bf16.msra.mxu0 %v677
      %713 = vmatpush.bf16.msra.mxu0 %v676
      %714 = vmatpush.bf16.msra.mxu0 %v675
      %715 = vmatmul.bf16.gmra.mxu0 %v483
      %v716 = vpop.f32.mrf.mxu0
      %v717 = vadd.f32 %v289, %v716
      %v718 = vpop.f32.mrf.mxu0
      %v719 = vadd.f32 %v289, %v718
      %720 = vmatmul.bf16.gmra.mxu0 %v485
      %v721 = vpop.f32.mrf.mxu0
      %v722 = vadd.f32 %v289, %v721
      %v723 = vpop.f32.mrf.mxu0
      %v724 = vadd.f32 %v289, %v723
      %725 = vmatmul.bf16.gmra.mxu0 %v487
      %v726 = vpop.f32.mrf.mxu0
      %v727 = vadd.f32 %v289, %v726
      %v728 = vpop.f32.mrf.mxu0
      %v729 = vadd.f32 %v289, %v728
      %730 = vmatmul.bf16.gmra.mxu0 %v489
      %v731 = vpop.f32.mrf.mxu0
      %v732 = vadd.f32 %v289, %v731
      %v733 = vpop.f32.mrf.mxu0
      %v734 = vadd.f32 %v289, %v733
      %735 = vmatmul.bf16.gmra.mxu0 %v491
      %v736 = vpop.f32.mrf.mxu0
      %v737 = vadd.f32 %v289, %v736
      %v738 = vpop.f32.mrf.mxu0
      %v739 = vadd.f32 %v289, %v738
      %740 = vmatmul.bf16.gmra.mxu0 %v493
      %v741 = vpop.f32.mrf.mxu0
      %v742 = vadd.f32 %v289, %v741
      %v743 = vpop.f32.mrf.mxu0
      %v744 = vadd.f32 %v289, %v743
      %745 = vmatmul.bf16.gmra.mxu0 %v495
      %v746 = vpop.f32.mrf.mxu0
      %v747 = vadd.f32 %v289, %v746
      %v748 = vpop.f32.mrf.mxu0
      %v749 = vadd.f32 %v289, %v748
      %750 = vmatmul.bf16.gmra.mxu0 %v497
      %v751 = vpop.f32.mrf.mxu0
      %v752 = vadd.f32 %v289, %v751
      %v753 = vpop.f32.mrf.mxu0
      %v754 = vadd.f32 %v289, %v753
      %755 = vmatmul.bf16.gmra.mxu0 %v499
      %v756 = vpop.f32.mrf.mxu0
      %v757 = vadd.f32 %v289, %v756
      %v758 = vpop.f32.mrf.mxu0
      %v759 = vadd.f32 %v289, %v758
      %760 = vmatmul.bf16.gmra.mxu0 %v501
      %v761 = vpop.f32.mrf.mxu0
      %v762 = vadd.f32 %v289, %v761
      %v763 = vpop.f32.mrf.mxu0
      %v764 = vadd.f32 %v289, %v763
      %765 = vmatmul.bf16.gmra.mxu0 %v503
      %v766 = vpop.f32.mrf.mxu0
      %v767 = vadd.f32 %v289, %v766
      %v768 = vpop.f32.mrf.mxu0
      %v769 = vadd.f32 %v289, %v768
      %770 = vmatmul.bf16.gmra.mxu0 %v505
      %v771 = vpop.f32.mrf.mxu0
      %v772 = vadd.f32 %v289, %v771
      %v773 = vpop.f32.mrf.mxu0
      %v774 = vadd.f32 %v289, %v773
      %775 = vmatmul.bf16.gmra.mxu0 %v507
      %v776 = vpop.f32.mrf.mxu0
      %v777 = vadd.f32 %v289, %v776
      %v778 = vpop.f32.mrf.mxu0
      %v779 = vadd.f32 %v289, %v778
      %780 = vmatmul.bf16.gmra.mxu0 %v509
      %v781 = vpop.f32.mrf.mxu0
      %v782 = vadd.f32 %v289, %v781
      %v783 = vpop.f32.mrf.mxu0
      %v784 = vadd.f32 %v289, %v783
      %785 = vmatmul.bf16.gmra.mxu0 %v511
      %v786 = vpop.f32.mrf.mxu0
      %v787 = vadd.f32 %v289, %v786
      %v788 = vpop.f32.mrf.mxu0
      %v789 = vadd.f32 %v289, %v788
      %790 = vmatmul.bf16.gmra.mxu0 %v513
      %v791 = vpop.f32.mrf.mxu0
      %v792 = vadd.f32 %v289, %v791
      %v793 = vpop.f32.mrf.mxu0
      %v794 = vadd.f32 %v289, %v793
      %795 = vmatmul.bf16.gmra.mxu0 %v515
      %v796 = vpop.f32.mrf.mxu0
      %v797 = vadd.f32 %v289, %v796
      %v798 = vpop.f32.mrf.mxu0
      %v799 = vadd.f32 %v289, %v798
      %800 = vmatmul.bf16.gmra.mxu0 %v517
      %v801 = vpop.f32.mrf.mxu0
      %v802 = vadd.f32 %v289, %v801
      %v803 = vpop.f32.mrf.mxu0
      %v804 = vadd.f32 %v289, %v803
      %805 = vmatmul.bf16.gmra.mxu0 %v519
      %v806 = vpop.f32.mrf.mxu0
      %v807 = vadd.f32 %v289, %v806
      %v808 = vpop.f32.mrf.mxu0
      %v809 = vadd.f32 %v289, %v808
      %810 = vmatmul.bf16.gmra.mxu0 %v521
      %v811 = vpop.f32.mrf.mxu0
      %v812 = vadd.f32 %v289, %v811
      %v813 = vpop.f32.mrf.mxu0
      %v814 = vadd.f32 %v289, %v813
      %815 = vmatmul.bf16.gmra.mxu0 %v523
      %v816 = vpop.f32.mrf.mxu0
      %v817 = vadd.f32 %v289, %v816
      %v818 = vpop.f32.mrf.mxu0
      %v819 = vadd.f32 %v289, %v818
      %820 = vmatmul.bf16.gmra.mxu0 %v525
      %v821 = vpop.f32.mrf.mxu0
      %v822 = vadd.f32 %v289, %v821
      %v823 = vpop.f32.mrf.mxu0
      %v824 = vadd.f32 %v289, %v823
      %825 = vmatmul.bf16.gmra.mxu0 %v527
      %v826 = vpop.f32.mrf.mxu0
      %v827 = vadd.f32 %v289, %v826
      %v828 = vpop.f32.mrf.mxu0
      %v829 = vadd.f32 %v289, %v828
      %830 = vmatmul.bf16.gmra.mxu0 %v529
      %v831 = vpop.f32.mrf.mxu0
      %v832 = vadd.f32 %v289, %v831
      %v833 = vpop.f32.mrf.mxu0
      %v834 = vadd.f32 %v289, %v833
      %835 = vmatmul.bf16.gmra.mxu0 %v531
      %v836 = vpop.f32.mrf.mxu0
      %v837 = vadd.f32 %v289, %v836
      %v838 = vpop.f32.mrf.mxu0
      %v839 = vadd.f32 %v289, %v838
      %840 = vmatmul.bf16.gmra.mxu0 %v533
      %v841 = vpop.f32.mrf.mxu0
      %v842 = vadd.f32 %v289, %v841
      %v843 = vpop.f32.mrf.mxu0
      %v844 = vadd.f32 %v289, %v843
      %845 = vmatmul.bf16.gmra.mxu0 %v535
      %v846 = vpop.f32.mrf.mxu0
      %v847 = vadd.f32 %v289, %v846
      %v848 = vpop.f32.mrf.mxu0
      %v849 = vadd.f32 %v289, %v848
      %850 = vmatmul.bf16.gmra.mxu0 %v537
      %v851 = vpop.f32.mrf.mxu0
      %v852 = vadd.f32 %v289, %v851
      %v853 = vpop.f32.mrf.mxu0
      %v854 = vadd.f32 %v289, %v853
      %855 = vmatmul.bf16.gmra.mxu0 %v539
      %v856 = vpop.f32.mrf.mxu0
      %v857 = vadd.f32 %v289, %v856
      %v858 = vpop.f32.mrf.mxu0
      %v859 = vadd.f32 %v289, %v858
      %860 = vmatmul.bf16.gmra.mxu0 %v541
      %v861 = vpop.f32.mrf.mxu0
      %v862 = vadd.f32 %v289, %v861
      %v863 = vpop.f32.mrf.mxu0
      %v864 = vadd.f32 %v289, %v863
      %865 = vmatmul.bf16.gmra.mxu0 %v543
      %v866 = vpop.f32.mrf.mxu0
      %v867 = vadd.f32 %v289, %v866
      %v868 = vpop.f32.mrf.mxu0
      %v869 = vadd.f32 %v289, %v868
      %870 = vmatmul.bf16.gmra.mxu0 %v545
      %v871 = vpop.f32.mrf.mxu0
      %v872 = vadd.f32 %v289, %v871
      %v873 = vpop.f32.mrf.mxu0
      %v874 = vadd.f32 %v289, %v873
      %875 = vdwg.mxu0
      %876 = vmatpush.bf16.msra.mxu0 %v690
      %877 = vmatpush.bf16.msra.mxu0 %v689
      %878 = vmatpush.bf16.msra.mxu0 %v688
      %879 = vmatpush.bf16.msra.mxu0 %v687
      %880 = vmatpush.bf16.msra.mxu0 %v686
      %881 = vmatpush.bf16.msra.mxu0 %v685
      %882 = vmatpush.bf16.msra.mxu0 %v684
      %883 = vmatpush.bf16.msra.mxu0 %v683
      %884 = vmatmul.bf16.gmra.mxu0 %v484
      %v885 = vpop.f32.mrf.mxu0
      %v886 = vadd.f32 %v717, %v885
      %v887 = vpop.f32.mrf.mxu0
      %v888 = vadd.f32 %v719, %v887
      %889 = vmatmul.bf16.gmra.mxu0 %v486
      %v890 = vpop.f32.mrf.mxu0
      %v891 = vadd.f32 %v722, %v890
      %v892 = vpop.f32.mrf.mxu0
      %v893 = vadd.f32 %v724, %v892
      %894 = vmatmul.bf16.gmra.mxu0 %v488
      %v895 = vpop.f32.mrf.mxu0
      %v896 = vadd.f32 %v727, %v895
      %v897 = vpop.f32.mrf.mxu0
      %v898 = vadd.f32 %v729, %v897
      %899 = vmatmul.bf16.gmra.mxu0 %v490
      %v900 = vpop.f32.mrf.mxu0
      %v901 = vadd.f32 %v732, %v900
      %v902 = vpop.f32.mrf.mxu0
      %v903 = vadd.f32 %v734, %v902
      %904 = vmatmul.bf16.gmra.mxu0 %v492
      %v905 = vpop.f32.mrf.mxu0
      %v906 = vadd.f32 %v737, %v905
      %v907 = vpop.f32.mrf.mxu0
      %v908 = vadd.f32 %v739, %v907
      %909 = vmatmul.bf16.gmra.mxu0 %v494
      %v910 = vpop.f32.mrf.mxu0
      %v911 = vadd.f32 %v742, %v910
      %v912 = vpop.f32.mrf.mxu0
      %v913 = vadd.f32 %v744, %v912
      %914 = vmatmul.bf16.gmra.mxu0 %v496
      %v915 = vpop.f32.mrf.mxu0
      %v916 = vadd.f32 %v747, %v915
      %v917 = vpop.f32.mrf.mxu0
      %v918 = vadd.f32 %v749, %v917
      %919 = vmatmul.bf16.gmra.mxu0 %v498
      %v920 = vpop.f32.mrf.mxu0
      %v921 = vadd.f32 %v752, %v920
      %v922 = vpop.f32.mrf.mxu0
      %v923 = vadd.f32 %v754, %v922
      %924 = vmatmul.bf16.gmra.mxu0 %v500
      %v925 = vpop.f32.mrf.mxu0
      %v926 = vadd.f32 %v757, %v925
      %v927 = vpop.f32.mrf.mxu0
      %v928 = vadd.f32 %v759, %v927
      %929 = vmatmul.bf16.gmra.mxu0 %v502
      %v930 = vpop.f32.mrf.mxu0
      %v931 = vadd.f32 %v762, %v930
      %v932 = vpop.f32.mrf.mxu0
      %v933 = vadd.f32 %v764, %v932
      %934 = vmatmul.bf16.gmra.mxu0 %v504
      %v935 = vpop.f32.mrf.mxu0
      %v936 = vadd.f32 %v767, %v935
      %v937 = vpop.f32.mrf.mxu0
      %v938 = vadd.f32 %v769, %v937
      %939 = vmatmul.bf16.gmra.mxu0 %v506
      %v940 = vpop.f32.mrf.mxu0
      %v941 = vadd.f32 %v772, %v940
      %v942 = vpop.f32.mrf.mxu0
      %v943 = vadd.f32 %v774, %v942
      %944 = vmatmul.bf16.gmra.mxu0 %v508
      %v945 = vpop.f32.mrf.mxu0
      %v946 = vadd.f32 %v777, %v945
      %v947 = vpop.f32.mrf.mxu0
      %v948 = vadd.f32 %v779, %v947
      %949 = vmatmul.bf16.gmra.mxu0 %v510
      %v950 = vpop.f32.mrf.mxu0
      %v951 = vadd.f32 %v782, %v950
      %v952 = vpop.f32.mrf.mxu0
      %v953 = vadd.f32 %v784, %v952
      %954 = vmatmul.bf16.gmra.mxu0 %v512
      %v955 = vpop.f32.mrf.mxu0
      %v956 = vadd.f32 %v787, %v955
      %v957 = vpop.f32.mrf.mxu0
      %v958 = vadd.f32 %v789, %v957
      %959 = vmatmul.bf16.gmra.mxu0 %v514
      %v960 = vpop.f32.mrf.mxu0
      %v961 = vadd.f32 %v792, %v960
      %v962 = vpop.f32.mrf.mxu0
      %v963 = vadd.f32 %v794, %v962
      %964 = vmatmul.bf16.gmra.mxu0 %v516
      %v965 = vpop.f32.mrf.mxu0
      %v966 = vadd.f32 %v797, %v965
      %v967 = vpop.f32.mrf.mxu0
      %v968 = vadd.f32 %v799, %v967
      %969 = vmatmul.bf16.gmra.mxu0 %v518
      %v970 = vpop.f32.mrf.mxu0
      %v971 = vadd.f32 %v802, %v970
      %v972 = vpop.f32.mrf.mxu0
      %v973 = vadd.f32 %v804, %v972
      %974 = vmatmul.bf16.gmra.mxu0 %v520
      %v975 = vpop.f32.mrf.mxu0
      %v976 = vadd.f32 %v807, %v975
      %v977 = vpop.f32.mrf.mxu0
      %v978 = vadd.f32 %v809, %v977
      %979 = vmatmul.bf16.gmra.mxu0 %v522
      %v980 = vpop.f32.mrf.mxu0
      %v981 = vadd.f32 %v812, %v980
      %v982 = vpop.f32.mrf.mxu0
      %v983 = vadd.f32 %v814, %v982
      %984 = vmatmul.bf16.gmra.mxu0 %v524
      %v985 = vpop.f32.mrf.mxu0
      %v986 = vadd.f32 %v817, %v985
      %v987 = vpop.f32.mrf.mxu0
      %v988 = vadd.f32 %v819, %v987
      %989 = vmatmul.bf16.gmra.mxu0 %v526
      %v990 = vpop.f32.mrf.mxu0
      %v991 = vadd.f32 %v822, %v990
      %v992 = vpop.f32.mrf.mxu0
      %v993 = vadd.f32 %v824, %v992
      %994 = vmatmul.bf16.gmra.mxu0 %v528
      %v995 = vpop.f32.mrf.mxu0
      %v996 = vadd.f32 %v827, %v995
      %v997 = vpop.f32.mrf.mxu0
      %v998 = vadd.f32 %v829, %v997
      %999 = vmatmul.bf16.gmra.mxu0 %v530
      %v1000 = vpop.f32.mrf.mxu0
      %v1001 = vadd.f32 %v832, %v1000
      %v1002 = vpop.f32.mrf.mxu0
      %v1003 = vadd.f32 %v834, %v1002
      %1004 = vmatmul.bf16.gmra.mxu0 %v532
      %v1005 = vpop.f32.mrf.mxu0
      %v1006 = vadd.f32 %v837, %v1005
      %v1007 = vpop.f32.mrf.mxu0
      %v1008 = vadd.f32 %v839, %v1007
      %1009 = vmatmul.bf16.gmra.mxu0 %v534
      %v1010 = vpop.f32.mrf.mxu0
      %v1011 = vadd.f32 %v842, %v1010
      %v1012 = vpop.f32.mrf.mxu0
      %v1013 = vadd.f32 %v844, %v1012
      %1014 = vmatmul.bf16.gmra.mxu0 %v536
      %v1015 = vpop.f32.mrf.mxu0
      %v1016 = vadd.f32 %v847, %v1015
      %v1017 = vpop.f32.mrf.mxu0
      %v1018 = vadd.f32 %v849, %v1017
      %1019 = vmatmul.bf16.gmra.mxu0 %v538
      %v1020 = vpop.f32.mrf.mxu0
      %v1021 = vadd.f32 %v852, %v1020
      %v1022 = vpop.f32.mrf.mxu0
      %v1023 = vadd.f32 %v854, %v1022
      %1024 = vmatmul.bf16.gmra.mxu0 %v540
      %v1025 = vpop.f32.mrf.mxu0
      %v1026 = vadd.f32 %v857, %v1025
      %v1027 = vpop.f32.mrf.mxu0
      %v1028 = vadd.f32 %v859, %v1027
      %1029 = vmatmul.bf16.gmra.mxu0 %v542
      %v1030 = vpop.f32.mrf.mxu0
      %v1031 = vadd.f32 %v862, %v1030
      %v1032 = vpop.f32.mrf.mxu0
      %v1033 = vadd.f32 %v864, %v1032
      %1034 = vmatmul.bf16.gmra.mxu0 %v544
      %v1035 = vpop.f32.mrf.mxu0
      %v1036 = vadd.f32 %v867, %v1035
      %v1037 = vpop.f32.mrf.mxu0
      %v1038 = vadd.f32 %v869, %v1037
      %1039 = vmatmul.bf16.gmra.mxu0 %v546
      %v1040 = vpop.f32.mrf.mxu0
      %v1041 = vadd.f32 %v872, %v1040
      %v1042 = vpop.f32.mrf.mxu0
      %v1043 = vadd.f32 %v874, %v1042
      %1044 = vdwg.mxu0
      %v1045 = vmax.f32 %v886, 0.0
      %v1046 = vmax.f32 %v888, 0.0
      %v1047 = vmax.f32 %v891, 0.0
      %v1048 = vmax.f32 %v893, 0.0
      %v1049 = vmax.f32 %v896, 0.0
      %v1050 = vmax.f32 %v898, 0.0
      %v1051 = vmax.f32 %v901, 0.0
      %v1052 = vmax.f32 %v903, 0.0
      %v1053 = vmax.f32 %v906, 0.0
      %v1054 = vmax.f32 %v908, 0.0
      %v1055 = vmax.f32 %v911, 0.0
      %v1056 = vmax.f32 %v913, 0.0
      %v1057 = vmax.f32 %v916, 0.0
      %v1058 = vmax.f32 %v918, 0.0
      %v1059 = vmax.f32 %v921, 0.0
      %v1060 = vmax.f32 %v923, 0.0
      %v1061 = vmax.f32 %v926, 0.0
      %v1062 = vmax.f32 %v928, 0.0
      %v1063 = vmax.f32 %v931, 0.0
      %v1064 = vmax.f32 %v933, 0.0
      %v1065 = vmax.f32 %v936, 0.0
      %v1066 = vmax.f32 %v938, 0.0
      %v1067 = vmax.f32 %v941, 0.0
      %v1068 = vmax.f32 %v943, 0.0
      %v1069 = vmax.f32 %v946, 0.0
      %v1070 = vmax.f32 %v948, 0.0
      %v1071 = vmax.f32 %v951, 0.0
      %v1072 = vmax.f32 %v953, 0.0
      %v1073 = vmax.f32 %v956, 0.0
      %v1074 = vmax.f32 %v958, 0.0
      %v1075 = vmax.f32 %v961, 0.0
      %v1076 = vmax.f32 %v963, 0.0
      %v1077 = vmax.f32 %v966, 0.0
      %v1078 = vmax.f32 %v968, 0.0
      %v1079 = vmax.f32 %v971, 0.0
      %v1080 = vmax.f32 %v973, 0.0
      %v1081 = vmax.f32 %v976, 0.0
      %v1082 = vmax.f32 %v978, 0.0
      %v1083 = vmax.f32 %v981, 0.0
      %v1084 = vmax.f32 %v983, 0.0
      %v1085 = vmax.f32 %v986, 0.0
      %v1086 = vmax.f32 %v988, 0.0
      %v1087 = vmax.f32 %v991, 0.0
      %v1088 = vmax.f32 %v993, 0.0
      %v1089 = vmax.f32 %v996, 0.0
      %v1090 = vmax.f32 %v998, 0.0
      %v1091 = vmax.f32 %v1001, 0.0
      %v1092 = vmax.f32 %v1003, 0.0
      %v1093 = vmax.f32 %v1006, 0.0
      %v1094 = vmax.f32 %v1008, 0.0
      %v1095 = vmax.f32 %v1011, 0.0
      %v1096 = vmax.f32 %v1013, 0.0
      %v1097 = vmax.f32 %v1016, 0.0
      %v1098 = vmax.f32 %v1018, 0.0
      %v1099 = vmax.f32 %v1021, 0.0
      %v1100 = vmax.f32 %v1023, 0.0
      %v1101 = vmax.f32 %v1026, 0.0
      %v1102 = vmax.f32 %v1028, 0.0
      %v1103 = vmax.f32 %v1031, 0.0
      %v1104 = vmax.f32 %v1033, 0.0
      %v1105 = vmax.f32 %v1036, 0.0
      %v1106 = vmax.f32 %v1038, 0.0
      %v1107 = vmax.f32 %v1041, 0.0
      %v1108 = vmax.f32 %v1043, 0.0
      %v1109 = vtanh.pop %v1045
      %v1110 = vtanh.pop %v1046
      %v1111 = vtanh.pop %v1047
      %v1112 = vtanh.pop %v1048
      %v1113 = vtanh.pop %v1049
      %v1114 = vtanh.pop %v1050
      %v1115 = vtanh.pop %v1051
      %v1116 = vtanh.pop %v1052
      %v1117 = vtanh.pop %v1053
      %v1118 = vtanh.pop %v1054
      %v1119 = vtanh.pop %v1055
      %v1120 = vtanh.pop %v1056
      %v1121 = vtanh.pop %v1057
      %v1122 = vtanh.pop %v1058
      %v1123 = vtanh.pop %v1059
      %v1124 = vtanh.pop %v1060
      %v1125 = vtanh.pop %v1061
      %v1126 = vtanh.pop %v1062
      %v1127 = vtanh.pop %v1063
      %v1128 = vtanh.pop %v1064
      %v1129 = vtanh.pop %v1065
      %v1130 = vtanh.pop %v1066
      %v1131 = vtanh.pop %v1067
      %v1132 = vtanh.pop %v1068
      %v1133 = vtanh.pop %v1069
      %v1134 = vtanh.pop %v1070
      %v1135 = vtanh.pop %v1071
      %v1136 = vtanh.pop %v1072
      %v1137 = vtanh.pop %v1073
      %v1138 = vtanh.pop %v1074
      %v1139 = vtanh.pop %v1075
      %v1140 = vtanh.pop %v1076
      %v1141 = vtanh.pop %v1077
      %v1142 = vtanh.pop %v1078
      %v1143 = vtanh.pop %v1079
      %v1144 = vtanh.pop %v1080
      %v1145 = vtanh.pop %v1081
      %v1146 = vtanh.pop %v1082
      %v1147 = vtanh.pop %v1083
      %v1148 = vtanh.pop %v1084
      %v1149 = vtanh.pop %v1085
      %v1150 = vtanh.pop %v1086
      %v1151 = vtanh.pop %v1087
      %v1152 = vtanh.pop %v1088
      %v1153 = vtanh.pop %v1089
      %v1154 = vtanh.pop %v1090
      %v1155 = vtanh.pop %v1091
      %v1156 = vtanh.pop %v1092
      %v1157 = vtanh.pop %v1093
      %v1158 = vtanh.pop %v1094
      %v1159 = vtanh.pop %v1095
      %v1160 = vtanh.pop %v1096
      %v1161 = vtanh.pop %v1097
      %v1162 = vtanh.pop %v1098
      %v1163 = vtanh.pop %v1099
      %v1164 = vtanh.pop %v1100
      %v1165 = vtanh.pop %v1101
      %v1166 = vtanh.pop %v1102
      %v1167 = vtanh.pop %v1103
      %v1168 = vtanh.pop %v1104
      %v1169 = vtanh.pop %v1105
      %v1170 = vtanh.pop %v1106
      %v1171 = vtanh.pop %v1107
      %v1172 = vtanh.pop %v1108
      %1173 = vst [vmem:[%s190] sm:$0xff] %v1109
      %1174 = vst [vmem:[%s190 + $0x8] sm:$0xff] %v1110
      %1175 = vst [vmem:[%s190 + $0x10] sm:$0xff] %v1111
      %1176 = vst [vmem:[%s190 + $0x18] sm:$0xff] %v1112
      %1177 = vst [vmem:[%s190 + $0x20] sm:$0xff] %v1113
      %1178 = vst [vmem:[%s190 + $0x28] sm:$0xff] %v1114
      %1179 = vst [vmem:[%s190 + $0x30] sm:$0xff] %v1115
      %1180 = vst [vmem:[%s190 + $0x38] sm:$0xff] %v1116
      %1181 = vst [vmem:[%s190 + $0x40] sm:$0xff] %v1117
      %1182 = vst [vmem:[%s190 + $0x48] sm:$0xff] %v1118
      %1183 = vst [vmem:[%s190 + $0x50] sm:$0xff] %v1119
      %1184 = vst [vmem:[%s190 + $0x58] sm:$0xff] %v1120
      %1185 = vst [vmem:[%s190 + $0x60] sm:$0xff] %v1121
      %1186 = vst [vmem:[%s190 + $0x68] sm:$0xff] %v1122
      %1187 = vst [vmem:[%s190 + $0x70] sm:$0xff] %v1123
      %1188 = vst [vmem:[%s190 + $0x78] sm:$0xff] %v1124
      %1189 = vst [vmem:[%s190 + $0x80] sm:$0xff] %v1125
      %1190 = vst [vmem:[%s190 + $0x88] sm:$0xff] %v1126
      %1191 = vst [vmem:[%s190 + $0x90] sm:$0xff] %v1127
      %1192 = vst [vmem:[%s190 + $0x98] sm:$0xff] %v1128
      %1193 = vst [vmem:[%s190 + $0xa0] sm:$0xff] %v1129
      %1194 = vst [vmem:[%s190 + $0xa8] sm:$0xff] %v1130
      %1195 = vst [vmem:[%s190 + $0xb0] sm:$0xff] %v1131
      %1196 = vst [vmem:[%s190 + $0xb8] sm:$0xff] %v1132
      %1197 = vst [vmem:[%s190 + $0xc0] sm:$0xff] %v1133
      %1198 = vst [vmem:[%s190 + $0xc8] sm:$0xff] %v1134
      %1199 = vst [vmem:[%s190 + $0xd0] sm:$0xff] %v1135
      %1200 = vst [vmem:[%s190 + $0xd8] sm:$0xff] %v1136
      %1201 = vst [vmem:[%s190 + $0xe0] sm:$0xff] %v1137
      %1202 = vst [vmem:[%s190 + $0xe8] sm:$0xff] %v1138
      %1203 = vst [vmem:[%s190 + $0xf0] sm:$0xff] %v1139
      %1204 = vst [vmem:[%s190 + $0xf8] sm:$0xff] %v1140
      %1205 = vst [vmem:[%s190 + $0x100] sm:$0xff] %v1141
      %1206 = vst [vmem:[%s190 + $0x108] sm:$0xff] %v1142
      %1207 = vst [vmem:[%s190 + $0x110] sm:$0xff] %v1143
      %1208 = vst [vmem:[%s190 + $0x118] sm:$0xff] %v1144
      %1209 = vst [vmem:[%s190 + $0x120] sm:$0xff] %v1145
      %1210 = vst [vmem:[%s190 + $0x128] sm:$0xff] %v1146
      %1211 = vst [vmem:[%s190 + $0x130] sm:$0xff] %v1147
      %1212 = vst [vmem:[%s190 + $0x138] sm:$0xff] %v1148
      %1213 = vst [vmem:[%s190 + $0x140] sm:$0xff] %v1149
      %1214 = vst [vmem:[%s190 + $0x148] sm:$0xff] %v1150
      %1215 = vst [vmem:[%s190 + $0x150] sm:$0xff] %v1151
      %1216 = vst [vmem:[%s190 + $0x158] sm:$0xff] %v1152
      %1217 = vst [vmem:[%s190 + $0x160] sm:$0xff] %v1153
      %1218 = vst [vmem:[%s190 + $0x168] sm:$0xff] %v1154
      %1219 = vst [vmem:[%s190 + $0x170] sm:$0xff] %v1155
      %1220 = vst [vmem:[%s190 + $0x178] sm:$0xff] %v1156
      %1221 = vst [vmem:[%s190 + $0x180] sm:$0xff] %v1157
      %1222 = vst [vmem:[%s190 + $0x188] sm:$0xff] %v1158
      %1223 = vst [vmem:[%s190 + $0x190] sm:$0xff] %v1159
      %1224 = vst [vmem:[%s190 + $0x198] sm:$0xff] %v1160
      %1225 = vst [vmem:[%s190 + $0x1a0] sm:$0xff] %v1161
      %1226 = vst [vmem:[%s190 + $0x1a8] sm:$0xff] %v1162
      %1227 = vst [vmem:[%s190 + $0x1b0] sm:$0xff] %v1163
      %1228 = vst [vmem:[%s190 + $0x1b8] sm:$0xff] %v1164
      %1229 = vst [vmem:[%s190 + $0x1c0] sm:$0xff] %v1165
      %1230 = vst [vmem:[%s190 + $0x1c8] sm:$0xff] %v1166
      %1231 = vst [vmem:[%s190 + $0x1d0] sm:$0xff] %v1167
      %1232 = vst [vmem:[%s190 + $0x1d8] sm:$0xff] %v1168
      %1233 = vst [vmem:[%s190 + $0x1e0] sm:$0xff] %v1169
      %1234 = vst [vmem:[%s190 + $0x1e8] sm:$0xff] %v1170
      %1235 = vst [vmem:[%s190 + $0x1f0] sm:$0xff] %v1171
      %1236 = vst [vmem:[%s190 + $0x1f8] sm:$0xff] %v1172
      %p1237 = scmp.lt.s32.totalorder %s14, 3
      %s1238 = scalar_select %p1237, %s14, 3
      %s1239 = smul.addr %s1238, 64
      %s1240 = smul.addr %s1239, 8
      %s1241 = scalar_lea.vmem %s3, %s1240
      // Predicated region
      $region33: #{decoder_forward.9} parent=31 // pred_check
        %p1242 = pneg %p105
      $region34: #{decoder_forward.9} parent=31 // pred_check_branch
        %1244 = sbr.rel (%p1242) target = $region36
      $region35: #{decoder_forward.9} parent=31 // pred_region
        _
      $region36: #{decoder_forward.9} parent=31 // pred_fallthru
        _
    $region32: #{decoder_forward.9} parent=5 // pred_fallthru
      _
    %p1245 = scmp.le.s32.totalorder 2, %s9
    // Predicated region
    $region37: #{decoder_forward.9} parent=5 // pred_check
      %p1246 = pneg %p1245
    $region38: #{decoder_forward.9} parent=5 // pred_check_branch
      %1248 = sbr.rel (%p1246) target = $region40
    $region39: #{decoder_forward.9} parent=5 // pred_region
      %s1249 = ssub.s32 %s9, 2
      // Predicated region
      $region41: #{decoder_forward.9} parent=39 // pred_check
        %p1250 = pneg %p111
      $region42: #{decoder_forward.9} parent=39 // pred_check_branch
        %1252 = sbr.rel (%p1250) target = $region44
      $region43: #{decoder_forward.9} parent=39 // pred_region
        %p1253 = scmp.lt.s32.totalorder %s15, 3
        %s1254 = scalar_select %p1253, %s15, 3
        %s1255 = smul.addr %s1254, 64
        %s1256 = smul.addr %s1255, 8
        %s1257 = scalar_lea.vmem %s3, %s1256
      $region44: #{decoder_forward.9} parent=39 // pred_fallthru
        _
    $region40: #{decoder_forward.9} parent=5 // pred_fallthru
      _
  $region6: #{decoder_forward.9} parent=0 // loop_footer
    %s13 = sadd.s32 1, %s9
  $region7: #{decoder_forward.9} parent=0 // loop_footer_branch
    %8 = sbr.rel target = $region3
  $region8: #{decoder_forward.9} parent=0 // loop_exit
    _

</llo_original>
